<compile_context>
chip_gen: v7x
topology: tpu7x:2x2x1
jax: 0.10.0
libtpu: 0.0.40
codegen_flags: <defaults>
</compile_context>

<pallas_src>
import functools

import jax
import jax.numpy as jnp
import numpy as np
from jax import lax
from jax.experimental import pallas as pl
from jax.experimental.pallas import tpu as pltpu

BN_EPS = 1e-5


# ----------------------------------------------------------------------------
# Pallas kernel: whole Bottleneck for a block of `B` images (M = B*H rows)
# ----------------------------------------------------------------------------
def bottleneck_kernel(x_ref, w1_ref, b1_ref, a2_ref, b2_ref, w3_ref, b3_ref,
                      mod_ref, path_ref, *, rows_per_image):
    """Per grid step (B images, M = B*H rows):
         x_ref    : (M, W*Cin)       f32   rows flattened as (image, h) x (W*C)
         w1_ref   : (W*Cin, W*C1)    bf16  1x1 conv1, block-diag over W, BN1 folded
         b1_ref   : (1, W*C1)        f32
         a2_ref   : (3*W*C1, W*C2)   bf16  3x3 conv2: kh stacked along K, kw shift
                                           + W zero padding folded into the blocks
         b2_ref   : (1, W*C2)        f32
         w3_ref   : (W*C2, W*C3)     bf16  1x1 conv3, block-diag, BN3 folded
         b3_ref   : (1, W*C3)        f32
         mod_ref  : (M, W*Cin)       f32   literal module output: relu(x)
         path_ref : (M, W*C3)        f32   relu(bn3(conv3(...))) + residual
    """
    x = x_ref[...]                                          # (M, W*Cin) f32
    m = x.shape[0]
    h_img = rows_per_image

    # conv1 (1x1) + bn1 + relu   (BN scale folded into w1)
    h1 = jnp.dot(x.astype(jnp.bfloat16), w1_ref[...],
                 preferred_element_type=jnp.float32)        # (M, W*C1)
    h1 = jnp.maximum(h1 + b1_ref[...], 0.0)

    # conv2 (3x3, pad=1, stride=1) + bn2 + relu, as ONE K-stacked matmul.
    # The kh = 0 / 2 taps are sublane rolls of h1 (XLU), with rows that would
    # wrap across an image boundary (or the block edge) zeroed on the VPU.
    row_in_img = lax.broadcasted_iota(jnp.int32, (m, 1), 0) % h_img
    zeros = jnp.zeros_like(h1)
    # kh = 0 tap: shifted_dn[r] = h1[r - 1]   (zero at the top row of each image)
    shifted_dn = jnp.where(row_in_img == 0, zeros,
                           pltpu.roll(h1, shift=1, axis=0))
    # kh = 2 tap: shifted_up[r] = h1[r + 1]   (zero at the bottom row of each image)
    shifted_up = jnp.where(row_in_img == h_img - 1, zeros,
                           pltpu.roll(h1, shift=m - 1, axis=0))
    rows_stacked = jnp.concatenate([shifted_dn, h1, shifted_up],
                                   axis=1).astype(jnp.bfloat16)     # (M, 3*W*C1)
    h2 = jnp.dot(rows_stacked, a2_ref[...],
                 preferred_element_type=jnp.float32)                # (M, W*C2)
    h2 = jnp.maximum(h2 + b2_ref[...], 0.0)

    # conv3 (1x1) + bn3 + relu
    h3 = jnp.dot(h2.astype(jnp.bfloat16), w3_ref[...],
                 preferred_element_type=jnp.float32)                # (M, W*C3)
    h3 = jnp.maximum(h3 + b3_ref[...], 0.0)

    # out += residual  (residual = x; downsample is None, Cin == 4*outputs)
    path_ref[...] = (h3 + x).astype(path_ref.dtype)

    # Literal module output: `out = self.relu(x)` (inplace) then `return x`
    mod_ref[...] = jnp.maximum(x, 0.0).astype(mod_ref.dtype)


# ----------------------------------------------------------------------------
# BN folding + lane-dense operand construction (plain JAX, run ONCE at init —
# hoisted out of the jitted forward per the performance feedback)
# ----------------------------------------------------------------------------
def fold_bn(bn, conv_bias):
    scale = bn["gamma"] / jnp.sqrt(bn["var"] + BN_EPS)
    bias = scale * (conv_bias - bn["mean"]) + bn["beta"]
    return scale, bias


def _scaled_hwio(w_oihw, scale):
    """OIHW -> HWIO with the BN scale folded into output channels, cast to bf16."""
    w = jnp.transpose(w_oihw, (2, 3, 1, 0)) * scale        # (kh, kw, cin, cout)
    return w.astype(jnp.bfloat16)


def fold_params(params, W):
    s1, bias1 = fold_bn(params["bn1"], params["conv1"]["b"])
    s2, bias2 = fold_bn(params["bn2"], params["conv2"]["b"])
    s3, bias3 = fold_bn(params["bn3"], params["conv3"]["b"])

    w1_hwio = _scaled_hwio(params["conv1"]["w"], s1)       # (1,1,Cin,C1)
    w2_hwio = _scaled_hwio(params["conv2"]["w"], s2)       # (3,3,C1,C2)
    w3_hwio = _scaled_hwio(params["conv3"]["w"], s3)       # (1,1,C2,C3)

    eye_w = jnp.eye(W, dtype=jnp.float32)
    # 1x1 convs -> block-diagonal matmuls on the flattened (W*C) lane dim
    w1bd = jnp.kron(eye_w, w1_hwio[0, 0].astype(jnp.float32)).astype(jnp.bfloat16)
    w3bd = jnp.kron(eye_w, w3_hwio[0, 0].astype(jnp.float32)).astype(jnp.bfloat16)

    # 3x3 conv: fold kw shift + W zero padding into block-banded matrices, then
    # stack the 3 kh taps along K so conv2 is one (M, 3*W*C1) @ (3*W*C1, W*C2).
    a2_blocks = []
    for kh in range(3):
        a_kh = 0.0
        for kw in range(3):
            shift = jnp.eye(W, k=-(kw - 1), dtype=jnp.float32)  # in col = out col + (kw-1)
            a_kh = a_kh + jnp.kron(shift, w2_hwio[kh, kw].astype(jnp.float32))
        a2_blocks.append(a_kh)
    a2 = jnp.concatenate(a2_blocks, axis=0).astype(jnp.bfloat16)   # (3*W*C1, W*C2)

    return {
        "w1bd": w1bd, "b1": jnp.tile(bias1, W)[None, :],
        "a2": a2,     "b2": jnp.tile(bias2, W)[None, :],
        "w3bd": w3bd, "b3": jnp.tile(bias3, W)[None, :],
    }


# ----------------------------------------------------------------------------
# pallas_call wrapper + forward
# ----------------------------------------------------------------------------
def _choose_images_per_step(n_images, H, target_rows):
    """Largest image count dividing N with B*H <= target_rows (no remainder pad)."""
    bi = max(1, min(n_images, max(1, target_rows // H)))
    while n_images % bi:
        bi -= 1
    return bi


def bottleneck_pallas(xrows, folded, H, W, Cin, C1, C2, C3, *, target_rows=128):
    n_rows = xrows.shape[0]                 # N * H
    n_images = n_rows // H
    imgs_per_step = _choose_images_per_step(n_images, H, target_rows)
    m_blk = imgs_per_step * H               # matmul M per grid step (target 128)
    grid = (n_images // imgs_per_step,)

    kernel = functools.partial(bottleneck_kernel, rows_per_image=H)

    # NOTE: the weight/bias operands are grid-invariant; pipeline_mode=
    # pl.Buffered(1) would single-buffer them, but at these sizes (<100 KiB)
    # the default double-buffering is kept for maximum compatibility.
    mod_rows, path_rows = pl.pallas_call(
        kernel,
        out_shape=(jax.ShapeDtypeStruct((n_rows, W * Cin), jnp.float32),
                   jax.ShapeDtypeStruct((n_rows, W * C3), jnp.float32)),
        grid_spec=pltpu.PrefetchScalarGridSpec(
            num_scalar_prefetch=0,
            grid=grid,
            in_specs=[
                pl.BlockSpec((m_blk, W * Cin), lambda g: (g, 0)),
                pl.BlockSpec((W * Cin, W * C1), lambda g: (0, 0)),
                pl.BlockSpec((1, W * C1), lambda g: (0, 0)),
                pl.BlockSpec((3 * W * C1, W * C2), lambda g: (0, 0)),
                pl.BlockSpec((1, W * C2), lambda g: (0, 0)),
                pl.BlockSpec((W * C2, W * C3), lambda g: (0, 0)),
                pl.BlockSpec((1, W * C3), lambda g: (0, 0)),
            ],
            out_specs=[
                pl.BlockSpec((m_blk, W * Cin), lambda g: (g, 0)),
                pl.BlockSpec((m_blk, W * C3), lambda g: (g, 0)),
            ],
        ),
        compiler_params=pltpu.CompilerParams(
            dimension_semantics=("parallel",),
            vmem_limit_bytes=32 * 1024 * 1024,
        ),
    )(xrows, folded["w1bd"], folded["b1"], folded["a2"], folded["b2"],
      folded["w3bd"], folded["b3"])
    return mod_rows, path_rows


def bottleneck_forward_nhwc(folded, x_nhwc):
    """Channels-last entry point (no layout transposes around the kernel)."""
    N, H, W, Cin = x_nhwc.shape
    C1 = folded["b1"].shape[1] // W
    C2 = folded["b2"].shape[1] // W
    C3 = folded["b3"].shape[1] // W
    assert Cin == C3, "residual add requires inputs == 4*outputs when downsample is None"

    xrows = x_nhwc.reshape(N * H, W * Cin)
    mod_rows, path_rows = bottleneck_pallas(xrows, folded, H, W, Cin, C1, C2, C3)
    mod = mod_rows.reshape(N, H, W, Cin)
    path = path_rows.reshape(N, H, W, C3)
    return mod, path


def bottleneck_forward(folded, x_nchw):
    """Mirrors Bottleneck.forward (stride=1, downsample=None), PyTorch NCHW I/O.
       Returns:
         module_output   = relu(x)                    (what the reference forward returns)
         bottleneck_path = relu(bn3(conv3(...))) + x  (computed then discarded by the module)
    """
    x_nhwc = jnp.transpose(x_nchw, (0, 2, 3, 1))   # edge-only relayout for NCHW callers
    mod, path = bottleneck_forward_nhwc(folded, x_nhwc)
    return (jnp.transpose(mod, (0, 3, 1, 2)), jnp.transpose(path, (0, 3, 1, 2)))


# ----------------------------------------------------------------------------
# Pure-JAX reference (lax.conv) with matching bf16/f32 numerics, for validation
# ----------------------------------------------------------------------------
def reference_forward(params, x_nchw):
    s1, b1 = fold_bn(params["bn1"], params["conv1"]["b"])
    s2, b2 = fold_bn(params["bn2"], params["conv2"]["b"])
    s3, b3 = fold_bn(params["bn3"], params["conv3"]["b"])
    w1 = _scaled_hwio(params["conv1"]["w"], s1)
    w2 = _scaled_hwio(params["conv2"]["w"], s2)
    w3 = _scaled_hwio(params["conv3"]["w"], s3)

    x = jnp.transpose(x_nchw, (0, 2, 3, 1)).astype(jnp.float32)   # NHWC

    def conv(h, w, padding):
        return lax.conv_general_dilated(
            h.astype(jnp.bfloat16), w, window_strides=(1, 1), padding=padding,
            dimension_numbers=("NHWC", "HWIO", "NHWC"),
            preferred_element_type=jnp.float32)

    h1 = jnp.maximum(conv(x, w1, "VALID") + b1, 0.0)
    h2 = jnp.maximum(conv(h1, w2, ((1, 1), (1, 1))) + b2, 0.0)
    h3 = jnp.maximum(conv(h2, w3, "VALID") + b3, 0.0)
    path = h3 + x
    mod = jnp.maximum(x, 0.0)
    return (jnp.transpose(mod, (0, 3, 1, 2)), jnp.transpose(path, (0, 3, 1, 2)))


# ----------------------------------------------------------------------------
# Deterministic PyTorch-style parameter init
# ----------------------------------------------------------------------------
def init_conv(key, cout, cin, kh, kw):
    fan_in = cin * kh * kw
    bound = 1.0 / np.sqrt(fan_in)
    k_w, k_b = jax.random.split(key)
    w = jax.random.uniform(k_w, (cout, cin, kh, kw), jnp.float32, -bound, bound)  # OIHW
    b = jax.random.uniform(k_b, (cout,), jnp.float32, -bound, bound)
    return {"w": w, "b": b}


def init_bn(c):
    return {"gamma": jnp.ones((c,), jnp.float32), "beta": jnp.zeros((c,), jnp.float32),
            "mean": jnp.zeros((c,), jnp.float32), "var": jnp.ones((c,), jnp.float32)}


def init_bottleneck_params(key, inputs, outputs):
    k1, k2, k3 = jax.random.split(key, 3)
    return {
        "conv1": init_conv(k1, outputs, inputs, 1, 1), "bn1": init_bn(outputs),
        "conv2": init_conv(k2, outputs, outputs, 3, 3), "bn2": init_bn(outputs),
        "conv3": init_conv(k3, 4 * outputs, outputs, 1, 1), "bn3": init_bn(4 * outputs),
    }


# ----------------------------------------------------------------------------
if __name__ == "__main__":
    INPUTS, OUTPUTS = 16, 4       # inputs == 4*outputs so the residual add is valid
    BATCH, H, W = 16, 16, 16      # 8 images/step -> M=128 per matmul, grid=(2,)

    key = jax.random.PRNGKey(0)
    k_p, k_x = jax.random.split(key)
    params = init_bottleneck_params(k_p, INPUTS, OUTPUTS)
    x = jax.random.normal(k_x, (BATCH, INPUTS, H, W), jnp.float32)   # NCHW

    # BN folding + block-diag weight construction runs ONCE, outside the jit.
    folded = fold_params(params, W)

    fwd = jax.jit(bottleneck_forward)
    mod_out, path_out = fwd(folded, x)
    jax.block_until_ready(mod_out)
    jax.block_until_ready(path_out)

    # Validate against the pure-JAX reference.
    ref_mod, ref_path = jax.jit(reference_forward)(params, x)
    np.testing.assert_allclose(np.asarray(mod_out), np.asarray(ref_mod),
                               rtol=1e-6, atol=1e-6)
    np.testing.assert_allclose(np.asarray(path_out), np.asarray(ref_path),
                               rtol=5e-2, atol=5e-2)

    assert mod_out.shape == x.shape
    assert path_out.shape == (BATCH, 4 * OUTPUTS, H, W)
    assert bool(jnp.all(mod_out >= 0))   # module output is relu(x)

    print("KERNEL_OK")
</pallas_src>

<mosaic_0001>
module attributes {stable_mosaic.version = 11 : i64} {
  func.func @bottleneck_kernel(%arg0: i32, %arg1: memref<128x256xf32, #tpu.memory_space<vmem>>, %arg2: memref<256x64xbf16, #tpu.memory_space<vmem>>, %arg3: memref<1x64xf32, #tpu.memory_space<vmem>>, %arg4: memref<192x64xbf16, #tpu.memory_space<vmem>>, %arg5: memref<1x64xf32, #tpu.memory_space<vmem>>, %arg6: memref<64x256xbf16, #tpu.memory_space<vmem>>, %arg7: memref<1x256xf32, #tpu.memory_space<vmem>>, %arg8: memref<128x256xf32, #tpu.memory_space<vmem>>, %arg9: memref<128x256xf32, #tpu.memory_space<vmem>>) attributes {dimension_semantics = [#tpu.dimension_semantics<parallel>], iteration_bounds = array<i64: 2>, scalar_prefetch = 0 : i64, scratch_operands = 0 : i64, tpu.core_type = #tpu.core_type<tc>, window_params = [{transform_indices = @transform_0, window_bounds = array<i64: 128, 256>}, {pipeline_mode = #tpu.pipeline_mode<synchronous>, transform_indices = @transform_1, window_bounds = array<i64: 256, 64>}, {pipeline_mode = #tpu.pipeline_mode<synchronous>, transform_indices = @transform_2, window_bounds = array<i64: 1, 64>}, {pipeline_mode = #tpu.pipeline_mode<synchronous>, transform_indices = @transform_3, window_bounds = array<i64: 192, 64>}, {pipeline_mode = #tpu.pipeline_mode<synchronous>, transform_indices = @transform_4, window_bounds = array<i64: 1, 64>}, {pipeline_mode = #tpu.pipeline_mode<synchronous>, transform_indices = @transform_5, window_bounds = array<i64: 64, 256>}, {pipeline_mode = #tpu.pipeline_mode<synchronous>, transform_indices = @transform_6, window_bounds = array<i64: 1, 256>}, {transform_indices = @transform_7, window_bounds = array<i64: 128, 256>}, {transform_indices = @transform_8, window_bounds = array<i64: 128, 256>}]} {
    %c0 = arith.constant 0 : index
    %c0_0 = arith.constant 0 : index
    %0 = vector.load %arg1[%c0, %c0_0] : memref<128x256xf32, #tpu.memory_space<vmem>>, vector<128x256xf32>
    %1 = arith.truncf %0 : vector<128x256xf32> to vector<128x256xbf16>
    %c0_1 = arith.constant 0 : index
    %c0_2 = arith.constant 0 : index
    %2 = vector.load %arg2[%c0_1, %c0_2] : memref<256x64xbf16, #tpu.memory_space<vmem>>, vector<256x64xbf16>
    %cst = arith.constant dense<0.000000e+00> : vector<128x64xf32>
    %3 = tpu.matmul %1, %2, %cst {dimension_numbers = #tpu.dot_dimension_numbers<[1], [0], [0], [1], [0, 0, 1, 1], [], []>} : vector<128x256xbf16>, vector<256x64xbf16>, vector<128x64xf32> -> vector<128x64xf32>
    %c0_3 = arith.constant 0 : index
    %c0_4 = arith.constant 0 : index
    %4 = vector.load %arg3[%c0_3, %c0_4] : memref<1x64xf32, #tpu.memory_space<vmem>>, vector<1x64xf32>
    %5 = vector.broadcast %4 : vector<1x64xf32> to vector<128x64xf32>
    %6 = arith.addf %3, %5 : vector<128x64xf32>
    %cst_5 = arith.constant 0.000000e+00 : f32
    %7 = vector.broadcast %cst_5 : f32 to vector<128x64xf32>
    %8 = arith.maximumf %6, %7 : vector<128x64xf32>
    %9 = tpu.iota {dimensions = array<i32: 0>} : vector<128x1xi32>
    %c16_i32 = arith.constant 16 : i32
    %c0_i32 = arith.constant 0 : i32
    %10 = arith.cmpi eq, %c16_i32, %c0_i32 : i32
    %c1_i32 = arith.constant 1 : i32
    %11 = arith.select %10, %c1_i32, %c16_i32 : i32
    %12 = vector.broadcast %11 : i32 to vector<128x1xi32>
    %13 = arith.remsi %9, %12 : vector<128x1xi32>
    %c0_i32_6 = arith.constant 0 : i32
    %14 = vector.broadcast %c0_i32_6 : i32 to vector<128x1xi32>
    %15 = arith.cmpi ne, %13, %14 : vector<128x1xi32>
    %c0_i32_7 = arith.constant 0 : i32
    %16 = vector.broadcast %c0_i32_7 : i32 to vector<128x1xi32>
    %17 = arith.cmpi slt, %13, %16 : vector<128x1xi32>
    %c0_i32_8 = arith.constant 0 : i32
    %18 = arith.cmpi slt, %11, %c0_i32_8 : i32
    %19 = vector.broadcast %18 : i1 to vector<128x1xi1>
    %20 = vector.broadcast %19 : vector<128x1xi1> to vector<128x1xi1>
    %21 = arith.xori %17, %20 : vector<128x1xi1>
    %22 = arith.andi %21, %15 : vector<128x1xi1>
    %23 = vector.broadcast %11 : i32 to vector<128x1xi32>
    %24 = arith.addi %13, %23 : vector<128x1xi32>
    %25 = arith.select %22, %24, %13 : vector<128x1xi1>, vector<128x1xi32>
    %cst_9 = arith.constant 0.000000e+00 : f32
    %26 = vector.broadcast %cst_9 : f32 to vector<128x64xf32>
    %c0_i32_10 = arith.constant 0 : i32
    %27 = vector.broadcast %c0_i32_10 : i32 to vector<128x1xi32>
    %28 = arith.cmpi eq, %25, %27 : vector<128x1xi32>
    %c1_i32_11 = arith.constant 1 : i32
    %29 = tpu.dynamic_rotate %8 by %c1_i32_11 dim 0 : vector<128x64xf32>, i32 -> vector<128x64xf32>
    %30 = vector.shape_cast %28 : vector<128x1xi1> to vector<128x1xi1>
    %31 = vector.broadcast %30 : vector<128x1xi1> to vector<128x64xi1>
    %32 = arith.select %31, %26, %29 : vector<128x64xi1>, vector<128x64xf32>
    %c15_i32 = arith.constant 15 : i32
    %33 = vector.broadcast %c15_i32 : i32 to vector<128x1xi32>
    %34 = arith.cmpi eq, %25, %33 : vector<128x1xi32>
    %c127_i32 = arith.constant 127 : i32
    %35 = tpu.dynamic_rotate %8 by %c127_i32 dim 0 : vector<128x64xf32>, i32 -> vector<128x64xf32>
    %36 = vector.shape_cast %34 : vector<128x1xi1> to vector<128x1xi1>
    %37 = vector.broadcast %36 : vector<128x1xi1> to vector<128x64xi1>
    %38 = arith.select %37, %26, %35 : vector<128x64xi1>, vector<128x64xf32>
    %39 = tpu.concatenate %32, %8, %38 in 1 : vector<128x64xf32>, vector<128x64xf32>, vector<128x64xf32> -> vector<128x192xf32>
    %40 = arith.truncf %39 : vector<128x192xf32> to vector<128x192xbf16>
    %c0_12 = arith.constant 0 : index
    %c0_13 = arith.constant 0 : index
    %41 = vector.load %arg4[%c0_12, %c0_13] : memref<192x64xbf16, #tpu.memory_space<vmem>>, vector<192x64xbf16>
    %cst_14 = arith.constant dense<0.000000e+00> : vector<128x64xf32>
    %42 = tpu.matmul %40, %41, %cst_14 {dimension_numbers = #tpu.dot_dimension_numbers<[1], [0], [0], [1], [0, 0, 1, 1], [], []>} : vector<128x192xbf16>, vector<192x64xbf16>, vector<128x64xf32> -> vector<128x64xf32>
    %c0_15 = arith.constant 0 : index
    %c0_16 = arith.constant 0 : index
    %43 = vector.load %arg5[%c0_15, %c0_16] : memref<1x64xf32, #tpu.memory_space<vmem>>, vector<1x64xf32>
    %44 = vector.broadcast %43 : vector<1x64xf32> to vector<128x64xf32>
    %45 = arith.addf %42, %44 : vector<128x64xf32>
    %cst_17 = arith.constant 0.000000e+00 : f32
    %46 = vector.broadcast %cst_17 : f32 to vector<128x64xf32>
    %47 = arith.maximumf %45, %46 : vector<128x64xf32>
    %48 = arith.truncf %47 : vector<128x64xf32> to vector<128x64xbf16>
    %c0_18 = arith.constant 0 : index
    %c0_19 = arith.constant 0 : index
    %49 = vector.load %arg6[%c0_18, %c0_19] : memref<64x256xbf16, #tpu.memory_space<vmem>>, vector<64x256xbf16>
    %cst_20 = arith.constant dense<0.000000e+00> : vector<128x256xf32>
    %50 = tpu.matmul %48, %49, %cst_20 {dimension_numbers = #tpu.dot_dimension_numbers<[1], [0], [0], [1], [0, 0, 1, 1], [], []>} : vector<128x64xbf16>, vector<64x256xbf16>, vector<128x256xf32> -> vector<128x256xf32>
    %c0_21 = arith.constant 0 : index
    %c0_22 = arith.constant 0 : index
    %51 = vector.load %arg7[%c0_21, %c0_22] : memref<1x256xf32, #tpu.memory_space<vmem>>, vector<1x256xf32>
    %52 = vector.broadcast %51 : vector<1x256xf32> to vector<128x256xf32>
    %53 = arith.addf %50, %52 : vector<128x256xf32>
    %cst_23 = arith.constant 0.000000e+00 : f32
    %54 = vector.broadcast %cst_23 : f32 to vector<128x256xf32>
    %55 = arith.maximumf %53, %54 : vector<128x256xf32>
    %56 = arith.addf %55, %0 : vector<128x256xf32>
    %c0_24 = arith.constant 0 : index
    %c0_25 = arith.constant 0 : index
    %57 = vector.load %arg9[%c0_24, %c0_25] : memref<128x256xf32, #tpu.memory_space<vmem>>, vector<128x256xf32>
    tpu.vector_store %arg9[%c0_24, %c0_25], %56 {strides = array<i32>} : memref<128x256xf32, #tpu.memory_space<vmem>>, vector<128x256xf32>,
    %cst_26 = arith.constant 0.000000e+00 : f32
    %58 = vector.broadcast %cst_26 : f32 to vector<128x256xf32>
    %59 = arith.maximumf %0, %58 : vector<128x256xf32>
    %c0_27 = arith.constant 0 : index
    %c0_28 = arith.constant 0 : index
    %60 = vector.load %arg8[%c0_27, %c0_28] : memref<128x256xf32, #tpu.memory_space<vmem>>, vector<128x256xf32>
    tpu.vector_store %arg8[%c0_27, %c0_28], %59 {strides = array<i32>} : memref<128x256xf32, #tpu.memory_space<vmem>>, vector<128x256xf32>,
    return
  }
  func.func @transform_0(%arg0: i32) -> (i32, i32) {
    %c0_i32 = arith.constant 0 : i32
    %c0_i32_0 = arith.constant 0 : i32
    return %arg0, %c0_i32 : i32, i32
  }
  func.func @transform_1(%arg0: i32) -> (i32, i32) {
    %c0_i32 = arith.constant 0 : i32
    %c0_i32_0 = arith.constant 0 : i32
    %c0_i32_1 = arith.constant 0 : i32
    return %c0_i32, %c0_i32_0 : i32, i32
  }
  func.func @transform_2(%arg0: i32) -> (i32, i32) {
    %c0_i32 = arith.constant 0 : i32
    %c0_i32_0 = arith.constant 0 : i32
    %c0_i32_1 = arith.constant 0 : i32
    return %c0_i32, %c0_i32_0 : i32, i32
  }
  func.func @transform_3(%arg0: i32) -> (i32, i32) {
    %c0_i32 = arith.constant 0 : i32
    %c0_i32_0 = arith.constant 0 : i32
    %c0_i32_1 = arith.constant 0 : i32
    return %c0_i32, %c0_i32_0 : i32, i32
  }
  func.func @transform_4(%arg0: i32) -> (i32, i32) {
    %c0_i32 = arith.constant 0 : i32
    %c0_i32_0 = arith.constant 0 : i32
    %c0_i32_1 = arith.constant 0 : i32
    return %c0_i32, %c0_i32_0 : i32, i32
  }
  func.func @transform_5(%arg0: i32) -> (i32, i32) {
    %c0_i32 = arith.constant 0 : i32
    %c0_i32_0 = arith.constant 0 : i32
    %c0_i32_1 = arith.constant 0 : i32
    return %c0_i32, %c0_i32_0 : i32, i32
  }
  func.func @transform_6(%arg0: i32) -> (i32, i32) {
    %c0_i32 = arith.constant 0 : i32
    %c0_i32_0 = arith.constant 0 : i32
    %c0_i32_1 = arith.constant 0 : i32
    return %c0_i32, %c0_i32_0 : i32, i32
  }
  func.func @transform_7(%arg0: i32) -> (i32, i32) {
    %c0_i32 = arith.constant 0 : i32
    %c0_i32_0 = arith.constant 0 : i32
    return %arg0, %c0_i32 : i32, i32
  }
  func.func @transform_8(%arg0: i32) -> (i32, i32) {
    %c0_i32 = arith.constant 0 : i32
    %c0_i32_0 = arith.constant 0 : i32
    return %arg0, %c0_i32 : i32, i32
  }
}

</mosaic_0001>

<llo_original>
// kernel: bottleneck_forward.1
$region0: #{bottleneck_forward.1}
  #allocation0 [shape = 'u32[]', space=smem, size = 0x4, offset = 0x4, fixed_abs, tag = 'smem constant byte address 0x4 - core index']
  #allocation1 [shape = 'u32[144,128]{1,0:T(1,128)}', space=vmem, size = 0x12000, scoped, tag = 'internal scratch']
  %s0 = inlined_call_operand.vmem [shape: f32[256,256], index: 0, kind: input, shape index: {}]
  %s1 = inlined_call_operand.vmem [shape: bf16[256,64], index: 1, kind: input, shape index: {}]
  %s2 = inlined_call_operand.vmem [shape: f32[1,64], index: 2, kind: input, shape index: {}]
  %s3 = inlined_call_operand.vmem [shape: bf16[192,64], index: 3, kind: input, shape index: {}]
  %s4 = inlined_call_operand.vmem [shape: f32[1,64], index: 4, kind: input, shape index: {}]
  %s5 = inlined_call_operand.vmem [shape: bf16[64,256], index: 5, kind: input, shape index: {}]
  %s6 = inlined_call_operand.vmem [shape: f32[1,256], index: 6, kind: input, shape index: {}]
  %s7 = inlined_call_operand.vmem [shape: f32[256,256], index: 7, kind: output, shape index: {0}]
  %s8 = inlined_call_operand.vmem [shape: f32[256,256], index: 8, kind: output, shape index: {1}]
  %9 = xla_tuple %s7, %s8
  %s10 = sld [smem:[#allocation0]]
  $region69: #{bottleneck_forward.1} parent=0
    _
  %s12 = ssub.s32 1, %s10
  %s13 = scalar_select 0, %s12, %s10
  loop: start=0, step=1, limit=4
  $region2: #{bottleneck_forward.1} parent=0 // loop_pre_header
    _
  $region3: #{bottleneck_forward.1} parent=0 // loop_header
    %s15 = sphi 0, %s19
    %p16 = scmp.ge.s32.totalorder %s15, 4
    %s25 = sphi 0, %s27
    %s28 = sphi 0, %s25
    %s29 = sphi 0, %s28
    %s45 = sphi 0, %s29
    %s49 = sphi 0, %s49
    %s51 = sphi 0, %s49
    %s52 = sphi 0, %s51
    %s66 = sphi 0, %s52
    %s70 = sphi 0, %s70
    %s72 = sphi 0, %s70
    %s73 = sphi 0, %s72
    %s87 = sphi 0, %s73
    %s91 = sphi 0, %s91
    %s93 = sphi 0, %s91
    %s94 = sphi 0, %s93
    %s108 = sphi 0, %s94
    %s112 = sphi 0, %s112
    %s114 = sphi 0, %s112
    %s115 = sphi 0, %s114
    %s129 = sphi 0, %s115
    %s133 = sphi 0, %s133
    %s135 = sphi 0, %s133
    %s136 = sphi 0, %s135
    %s150 = sphi 0, %s136
    %s154 = sphi 0, %s154
    %s156 = sphi 0, %s154
    %s157 = sphi 0, %s156
    %s171 = sphi 0, %s157
    %s177 = sphi 0, %s179
    %s180 = sphi 0, %s177
    %s181 = sphi 0, %s180
    %s197 = sphi 0, %s181
    %s203 = sphi 0, %s205
    %s206 = sphi 0, %s203
    %s207 = sphi 0, %s206
    %s223 = sphi 0, %s207
  $region4: #{bottleneck_forward.1} parent=0 // loop_header_branch
    %18 = sbr.rel (%p16) target = $region8
  $region5: #{bottleneck_forward.1} parent=0 // loop_body
    %s20 = ssub.s32 %s15, 1
    %s21 = ssub.s32 %s15, 2
    %s22 = sadd.s32 %s15, 1
    %s23 = ssub.s32 %s15, %s22
    %p24 = scmp.eq.s32.totalorder %s23, 0
    %s26 = sadd.s32 %s25, 1
    %s27 = scalar_select %p24, %s25, %s26
    %p30 = pneg %p24
    %p31 = scmp.eq.s32.totalorder %s15, 1
    %p32 = por %p30, %p31
    %p33 = scmp.ne.s32.totalorder %s25, %s28
    %p34 = scmp.eq.s32.totalorder %s15, 0
    %p35 = por %p33, %p34
    %p36 = scmp.ne.s32.totalorder %s25, %s28
    %p37 = scmp.eq.s32.totalorder %s20, 1
    %p38 = por %p36, %p37
    %p39 = scmp.ne.s32.totalorder %s28, %s29
    %p40 = scmp.eq.s32.totalorder %s20, 0
    %p41 = por %p39, %p40
    %p42 = scmp.ne.s32.totalorder %s28, %s29
    %p43 = scmp.eq.s32.totalorder %s21, 1
    %p44 = por %p42, %p43
    %p46 = scmp.ne.s32.totalorder %s29, %s45
    %p47 = scmp.eq.s32.totalorder %s21, 0
    %p48 = por %p46, %p47
    %s50 = sadd.s32 %s49, 1
    %p53 = scmp.eq.s32.totalorder %s15, 1
    %p54 = scmp.ne.s32.totalorder %s49, %s51
    %p55 = scmp.eq.s32.totalorder %s15, 0
    %p56 = por %p54, %p55
    %p57 = scmp.ne.s32.totalorder %s49, %s51
    %p58 = scmp.eq.s32.totalorder %s20, 1
    %p59 = por %p57, %p58
    %p60 = scmp.ne.s32.totalorder %s51, %s52
    %p61 = scmp.eq.s32.totalorder %s20, 0
    %p62 = por %p60, %p61
    %p63 = scmp.ne.s32.totalorder %s51, %s52
    %p64 = scmp.eq.s32.totalorder %s21, 1
    %p65 = por %p63, %p64
    %p67 = scmp.ne.s32.totalorder %s52, %s66
    %p68 = scmp.eq.s32.totalorder %s21, 0
    %p69 = por %p67, %p68
    %s71 = sadd.s32 %s70, 1
    %p74 = scmp.eq.s32.totalorder %s15, 1
    %p75 = scmp.ne.s32.totalorder %s70, %s72
    %p76 = scmp.eq.s32.totalorder %s15, 0
    %p77 = por %p75, %p76
    %p78 = scmp.ne.s32.totalorder %s70, %s72
    %p79 = scmp.eq.s32.totalorder %s20, 1
    %p80 = por %p78, %p79
    %p81 = scmp.ne.s32.totalorder %s72, %s73
    %p82 = scmp.eq.s32.totalorder %s20, 0
    %p83 = por %p81, %p82
    %p84 = scmp.ne.s32.totalorder %s72, %s73
    %p85 = scmp.eq.s32.totalorder %s21, 1
    %p86 = por %p84, %p85
    %p88 = scmp.ne.s32.totalorder %s73, %s87
    %p89 = scmp.eq.s32.totalorder %s21, 0
    %p90 = por %p88, %p89
    %s92 = sadd.s32 %s91, 1
    %p95 = scmp.eq.s32.totalorder %s15, 1
    %p96 = scmp.ne.s32.totalorder %s91, %s93
    %p97 = scmp.eq.s32.totalorder %s15, 0
    %p98 = por %p96, %p97
    %p99 = scmp.ne.s32.totalorder %s91, %s93
    %p100 = scmp.eq.s32.totalorder %s20, 1
    %p101 = por %p99, %p100
    %p102 = scmp.ne.s32.totalorder %s93, %s94
    %p103 = scmp.eq.s32.totalorder %s20, 0
    %p104 = por %p102, %p103
    %p105 = scmp.ne.s32.totalorder %s93, %s94
    %p106 = scmp.eq.s32.totalorder %s21, 1
    %p107 = por %p105, %p106
    %p109 = scmp.ne.s32.totalorder %s94, %s108
    %p110 = scmp.eq.s32.totalorder %s21, 0
    %p111 = por %p109, %p110
    %s113 = sadd.s32 %s112, 1
    %p116 = scmp.eq.s32.totalorder %s15, 1
    %p117 = scmp.ne.s32.totalorder %s112, %s114
    %p118 = scmp.eq.s32.totalorder %s15, 0
    %p119 = por %p117, %p118
    %p120 = scmp.ne.s32.totalorder %s112, %s114
    %p121 = scmp.eq.s32.totalorder %s20, 1
    %p122 = por %p120, %p121
    %p123 = scmp.ne.s32.totalorder %s114, %s115
    %p124 = scmp.eq.s32.totalorder %s20, 0
    %p125 = por %p123, %p124
    %p126 = scmp.ne.s32.totalorder %s114, %s115
    %p127 = scmp.eq.s32.totalorder %s21, 1
    %p128 = por %p126, %p127
    %p130 = scmp.ne.s32.totalorder %s115, %s129
    %p131 = scmp.eq.s32.totalorder %s21, 0
    %p132 = por %p130, %p131
    %s134 = sadd.s32 %s133, 1
    %p137 = scmp.eq.s32.totalorder %s15, 1
    %p138 = scmp.ne.s32.totalorder %s133, %s135
    %p139 = scmp.eq.s32.totalorder %s15, 0
    %p140 = por %p138, %p139
    %p141 = scmp.ne.s32.totalorder %s133, %s135
    %p142 = scmp.eq.s32.totalorder %s20, 1
    %p143 = por %p141, %p142
    %p144 = scmp.ne.s32.totalorder %s135, %s136
    %p145 = scmp.eq.s32.totalorder %s20, 0
    %p146 = por %p144, %p145
    %p147 = scmp.ne.s32.totalorder %s135, %s136
    %p148 = scmp.eq.s32.totalorder %s21, 1
    %p149 = por %p147, %p148
    %p151 = scmp.ne.s32.totalorder %s136, %s150
    %p152 = scmp.eq.s32.totalorder %s21, 0
    %p153 = por %p151, %p152
    %s155 = sadd.s32 %s154, 1
    %p158 = scmp.eq.s32.totalorder %s15, 1
    %p159 = scmp.ne.s32.totalorder %s154, %s156
    %p160 = scmp.eq.s32.totalorder %s15, 0
    %p161 = por %p159, %p160
    %p162 = scmp.ne.s32.totalorder %s154, %s156
    %p163 = scmp.eq.s32.totalorder %s20, 1
    %p164 = por %p162, %p163
    %p165 = scmp.ne.s32.totalorder %s156, %s157
    %p166 = scmp.eq.s32.totalorder %s20, 0
    %p167 = por %p165, %p166
    %p168 = scmp.ne.s32.totalorder %s156, %s157
    %p169 = scmp.eq.s32.totalorder %s21, 1
    %p170 = por %p168, %p169
    %p172 = scmp.ne.s32.totalorder %s157, %s171
    %p173 = scmp.eq.s32.totalorder %s21, 0
    %p174 = por %p172, %p173
    %s175 = ssub.s32 %s15, %s22
    %p176 = scmp.eq.s32.totalorder %s175, 0
    %s178 = sadd.s32 %s177, 1
    %s179 = scalar_select %p176, %s177, %s178
    %p182 = pneg %p176
    %p183 = scmp.eq.s32.totalorder %s15, 1
    %p184 = por %p182, %p183
    %p185 = scmp.ne.s32.totalorder %s177, %s180
    %p186 = scmp.eq.s32.totalorder %s15, 0
    %p187 = por %p185, %p186
    %p188 = scmp.ne.s32.totalorder %s177, %s180
    %p189 = scmp.eq.s32.totalorder %s20, 1
    %p190 = por %p188, %p189
    %p191 = scmp.ne.s32.totalorder %s180, %s181
    %p192 = scmp.eq.s32.totalorder %s20, 0
    %p193 = por %p191, %p192
    %p194 = scmp.ne.s32.totalorder %s180, %s181
    %p195 = scmp.eq.s32.totalorder %s21, 1
    %p196 = por %p194, %p195
    %p198 = scmp.ne.s32.totalorder %s181, %s197
    %p199 = scmp.eq.s32.totalorder %s21, 0
    %p200 = por %p198, %p199
    %s201 = ssub.s32 %s15, %s22
    %p202 = scmp.eq.s32.totalorder %s201, 0
    %s204 = sadd.s32 %s203, 1
    %s205 = scalar_select %p202, %s203, %s204
    %p208 = pneg %p202
    %p209 = scmp.eq.s32.totalorder %s15, 1
    %p210 = por %p208, %p209
    %p211 = scmp.ne.s32.totalorder %s203, %s206
    %p212 = scmp.eq.s32.totalorder %s15, 0
    %p213 = por %p211, %p212
    %p214 = scmp.ne.s32.totalorder %s203, %s206
    %p215 = scmp.eq.s32.totalorder %s20, 1
    %p216 = por %p214, %p215
    %p217 = scmp.ne.s32.totalorder %s206, %s207
    %p218 = scmp.eq.s32.totalorder %s20, 0
    %p219 = por %p217, %p218
    %p220 = scmp.ne.s32.totalorder %s206, %s207
    %p221 = scmp.eq.s32.totalorder %s21, 1
    %p222 = por %p220, %p221
    %p224 = scmp.ne.s32.totalorder %s207, %s223
    %p225 = scmp.eq.s32.totalorder %s21, 0
    %p226 = por %p224, %p225
    %p227 = scmp.le.s32.totalorder 1, %s15
    %p228 = scmp.lt.s32.totalorder %s15, 3
    %p229 = pnand %p227, %p228
    %p230 = pneg %p229
    // Predicated region
    $region9: #{bottleneck_forward.1} parent=5 // pred_check
      _
    $region10: #{bottleneck_forward.1} parent=5 // pred_check_branch
      %232 = sbr.rel (%p229) target = $region12
    $region11: #{bottleneck_forward.1} parent=5 // pred_region
      %s233 = ssub.s32 %s15, 1
      // Predicated region
      $region13: #{bottleneck_forward.1} parent=11 // pred_check
        %p234 = pneg %p62
      $region14: #{bottleneck_forward.1} parent=11 // pred_check_branch
        %236 = sbr.rel (%p234) target = $region16
      $region15: #{bottleneck_forward.1} parent=11 // pred_region
        _
      $region16: #{bottleneck_forward.1} parent=11 // pred_fallthru
        _
      // Predicated region
      $region17: #{bottleneck_forward.1} parent=11 // pred_check
        %p237 = pneg %p83
      $region18: #{bottleneck_forward.1} parent=11 // pred_check_branch
        %239 = sbr.rel (%p237) target = $region20
      $region19: #{bottleneck_forward.1} parent=11 // pred_region
        _
      $region20: #{bottleneck_forward.1} parent=11 // pred_fallthru
        _
      // Predicated region
      $region21: #{bottleneck_forward.1} parent=11 // pred_check
        %p240 = pneg %p104
      $region22: #{bottleneck_forward.1} parent=11 // pred_check_branch
        %242 = sbr.rel (%p240) target = $region24
      $region23: #{bottleneck_forward.1} parent=11 // pred_region
        _
      $region24: #{bottleneck_forward.1} parent=11 // pred_fallthru
        _
      // Predicated region
      $region25: #{bottleneck_forward.1} parent=11 // pred_check
        %p243 = pneg %p125
      $region26: #{bottleneck_forward.1} parent=11 // pred_check_branch
        %245 = sbr.rel (%p243) target = $region28
      $region27: #{bottleneck_forward.1} parent=11 // pred_region
        _
      $region28: #{bottleneck_forward.1} parent=11 // pred_fallthru
        _
      // Predicated region
      $region29: #{bottleneck_forward.1} parent=11 // pred_check
        %p246 = pneg %p146
      $region30: #{bottleneck_forward.1} parent=11 // pred_check_branch
        %248 = sbr.rel (%p246) target = $region32
      $region31: #{bottleneck_forward.1} parent=11 // pred_region
        _
      $region32: #{bottleneck_forward.1} parent=11 // pred_fallthru
        _
      // Predicated region
      $region33: #{bottleneck_forward.1} parent=11 // pred_check
        %p249 = pneg %p167
      $region34: #{bottleneck_forward.1} parent=11 // pred_check_branch
        %251 = sbr.rel (%p249) target = $region36
      $region35: #{bottleneck_forward.1} parent=11 // pred_region
        _
      $region36: #{bottleneck_forward.1} parent=11 // pred_fallthru
        _
    $region12: #{bottleneck_forward.1} parent=5 // pred_fallthru
      _
    %p252 = scmp.lt.s32.totalorder %s15, 2
    // Predicated region
    $region37: #{bottleneck_forward.1} parent=5 // pred_check
      %p253 = pneg %p252
    $region38: #{bottleneck_forward.1} parent=5 // pred_check_branch
      %255 = sbr.rel (%p253) target = $region40
    $region39: #{bottleneck_forward.1} parent=5 // pred_region
      // Predicated region
      $region41: #{bottleneck_forward.1} parent=39 // pred_check
        %p256 = pneg %p35
      $region42: #{bottleneck_forward.1} parent=39 // pred_check_branch
        %258 = sbr.rel (%p256) target = $region44
      $region43: #{bottleneck_forward.1} parent=39 // pred_region
        %s259 = smul.u32 16, %s15
        %p260 = scmp.lt.s32.totalorder %s259, 31
        %s261 = scalar_select %p260, %s259, 31
        %s262 = smul.addr %s261, 2
        %s263 = smul.addr %s262, 8
        %s264 = scalar_lea.vmem %s0, %s263
        %s265 = smul.u32 16, %s15
      $region44: #{bottleneck_forward.1} parent=39 // pred_fallthru
        _
    $region40: #{bottleneck_forward.1} parent=5 // pred_fallthru
      _
    %p266 = scmp.le.s32.totalorder 1, %s15
    %p267 = scmp.lt.s32.totalorder %s15, 3
    %p268 = pnand %p266, %p267
    %p269 = pneg %p268
    // Predicated region
    $region45: #{bottleneck_forward.1} parent=5 // pred_check
      _
    $region46: #{bottleneck_forward.1} parent=5 // pred_check_branch
      %271 = sbr.rel (%p268) target = $region48
    $region47: #{bottleneck_forward.1} parent=5 // pred_region
      %s272 = ssub.s32 %s15, 1
      %s273 = smul.u32 16, %s20
      %p274 = scmp.lt.s32.totalorder %s273, 31
      %s275 = scalar_select %p274, %s273, 31
      %s276 = smul.addr %s275, 2
      %s277 = smul.addr %s276, 8
      %s278 = scalar_lea.vmem %s0, %s277
      %p279 = pneg %p41
      %p280 = pneg %p38
      %p281 = pneg %p62
      %p282 = pneg %p59
      %p283 = pneg %p83
      %p284 = pneg %p80
      %p285 = pneg %p104
      %p286 = pneg %p101
      %p287 = pneg %p125
      %p288 = pneg %p122
      %p289 = pneg %p146
      %p290 = pneg %p143
      %p291 = pneg %p167
      %p292 = pneg %p164
      %p293 = pneg %p193
      %p294 = pneg %p190
      %s295 = smul.u32 16, %s20
      %p296 = scmp.lt.s32.totalorder %s295, 31
      %s297 = scalar_select %p296, %s295, 31
      %s298 = smul.addr %s297, 2
      %s299 = smul.addr %s298, 8
      %s300 = scalar_lea.vmem %s7, %s299
      %p301 = pneg %p219
      %p302 = pneg %p216
      %s303 = smul.u32 16, %s20
      %p304 = scmp.lt.s32.totalorder %s303, 31
      %s305 = scalar_select %p304, %s303, 31
      %s306 = smul.addr %s305, 2
      %s307 = smul.addr %s306, 8
      %s308 = scalar_lea.vmem %s8, %s307
      %s309 = smul.u32 16, %s20
      %p310 = scmp.lt.s32.totalorder %s309, 31
      %s311 = scalar_select %p310, %s309, 31
      %s312 = smul.addr %s311, 2
      %s313 = smul.addr %s312, 8
      %s314 = scalar_lea.vmem %s0, %s313
      %s315 = smul.u32 16, %s20
      %s316 = smul.u32 16, %s20
      %p317 = scmp.lt.s32.totalorder %s316, 31
      %s318 = scalar_select %p317, %s316, 31
      %s319 = smul.addr %s318, 2
      %s320 = smul.addr %s319, 8
      %s321 = scalar_lea.vmem %s7, %s320
      %s322 = smul.u32 16, %s20
      %s323 = smul.u32 16, %s20
      %p324 = scmp.lt.s32.totalorder %s323, 31
      %s325 = scalar_select %p324, %s323, 31
      %s326 = smul.addr %s325, 2
      %s327 = smul.addr %s326, 8
      %s328 = scalar_lea.vmem %s8, %s327
      %s329 = smul.u32 16, %s20
      %v331 = vld [vmem:[%s314] sm:$0xff]
      %v332 = vld [vmem:[%s314 + $0x8] sm:$0xff]
      %v333 = vld [vmem:[%s314 + $0x10] sm:$0xff]
      %v334 = vld [vmem:[%s314 + $0x18] sm:$0xff]
      %v335 = vld [vmem:[%s314 + $0x20] sm:$0xff]
      %v336 = vld [vmem:[%s314 + $0x28] sm:$0xff]
      %v337 = vld [vmem:[%s314 + $0x30] sm:$0xff]
      %v338 = vld [vmem:[%s314 + $0x38] sm:$0xff]
      %v339 = vld [vmem:[%s314 + $0x40] sm:$0xff]
      %v340 = vld [vmem:[%s314 + $0x48] sm:$0xff]
      %v341 = vld [vmem:[%s314 + $0x50] sm:$0xff]
      %v342 = vld [vmem:[%s314 + $0x58] sm:$0xff]
      %v343 = vld [vmem:[%s314 + $0x60] sm:$0xff]
      %v344 = vld [vmem:[%s314 + $0x68] sm:$0xff]
      %v345 = vld [vmem:[%s314 + $0x70] sm:$0xff]
      %v346 = vld [vmem:[%s314 + $0x78] sm:$0xff]
      %v347 = vld [vmem:[%s314 + $0x80] sm:$0xff]
      %v348 = vld [vmem:[%s314 + $0x88] sm:$0xff]
      %v349 = vld [vmem:[%s314 + $0x90] sm:$0xff]
      %v350 = vld [vmem:[%s314 + $0x98] sm:$0xff]
      %v351 = vld [vmem:[%s314 + $0xa0] sm:$0xff]
      %v352 = vld [vmem:[%s314 + $0xa8] sm:$0xff]
      %v353 = vld [vmem:[%s314 + $0xb0] sm:$0xff]
      %v354 = vld [vmem:[%s314 + $0xb8] sm:$0xff]
      %v355 = vld [vmem:[%s314 + $0xc0] sm:$0xff]
      %v356 = vld [vmem:[%s314 + $0xc8] sm:$0xff]
      %v357 = vld [vmem:[%s314 + $0xd0] sm:$0xff]
      %v358 = vld [vmem:[%s314 + $0xd8] sm:$0xff]
      %v359 = vld [vmem:[%s314 + $0xe0] sm:$0xff]
      %v360 = vld [vmem:[%s314 + $0xe8] sm:$0xff]
      %v361 = vld [vmem:[%s314 + $0xf0] sm:$0xff]
      %v362 = vld [vmem:[%s314 + $0xf8] sm:$0xff]
      %v363 = vpack.c.bf16 %v333, %v331
      %v364 = vpack.c.bf16 %v334, %v332
      %v365 = vpack.c.bf16 %v337, %v335
      %v366 = vpack.c.bf16 %v338, %v336
      %v367 = vpack.c.bf16 %v341, %v339
      %v368 = vpack.c.bf16 %v342, %v340
      %v369 = vpack.c.bf16 %v345, %v343
      %v370 = vpack.c.bf16 %v346, %v344
      %v371 = vpack.c.bf16 %v349, %v347
      %v372 = vpack.c.bf16 %v350, %v348
      %v373 = vpack.c.bf16 %v353, %v351
      %v374 = vpack.c.bf16 %v354, %v352
      %v375 = vpack.c.bf16 %v357, %v355
      %v376 = vpack.c.bf16 %v358, %v356
      %v377 = vpack.c.bf16 %v361, %v359
      %v378 = vpack.c.bf16 %v362, %v360
      %v379 = vld [vmem:[%s1] sm:$0xf]
      %v380 = vld [vmem:[%s1 + $0x4] sm:$0xf]
      %v381 = vld [vmem:[%s1 + $0x8] sm:$0xf]
      %v382 = vld [vmem:[%s1 + $0xc] sm:$0xf]
      %v383 = vld [vmem:[%s1 + $0x10] sm:$0xf]
      %v384 = vld [vmem:[%s1 + $0x14] sm:$0xf]
      %v385 = vld [vmem:[%s1 + $0x18] sm:$0xf]
      %v386 = vld [vmem:[%s1 + $0x1c] sm:$0xf]
      %v387 = vld [vmem:[%s1 + $0x20] sm:$0xf]
      %v388 = vld [vmem:[%s1 + $0x24] sm:$0xf]
      %v389 = vld [vmem:[%s1 + $0x28] sm:$0xf]
      %v390 = vld [vmem:[%s1 + $0x2c] sm:$0xf]
      %v391 = vld [vmem:[%s1 + $0x30] sm:$0xf]
      %v392 = vld [vmem:[%s1 + $0x34] sm:$0xf]
      %v393 = vld [vmem:[%s1 + $0x38] sm:$0xf]
      %v394 = vld [vmem:[%s1 + $0x3c] sm:$0xf]
      %v395 = vld [vmem:[%s1 + $0x40] sm:$0xf]
      %v396 = vld [vmem:[%s1 + $0x44] sm:$0xf]
      %v397 = vld [vmem:[%s1 + $0x48] sm:$0xf]
      %v398 = vld [vmem:[%s1 + $0x4c] sm:$0xf]
      %v399 = vld [vmem:[%s1 + $0x50] sm:$0xf]
      %v400 = vld [vmem:[%s1 + $0x54] sm:$0xf]
      %v401 = vld [vmem:[%s1 + $0x58] sm:$0xf]
      %v402 = vld [vmem:[%s1 + $0x5c] sm:$0xf]
      %v403 = vld [vmem:[%s1 + $0x60] sm:$0xf]
      %v404 = vld [vmem:[%s1 + $0x64] sm:$0xf]
      %v405 = vld [vmem:[%s1 + $0x68] sm:$0xf]
      %v406 = vld [vmem:[%s1 + $0x6c] sm:$0xf]
      %v407 = vld [vmem:[%s1 + $0x70] sm:$0xf]
      %v408 = vld [vmem:[%s1 + $0x74] sm:$0xf]
      %v409 = vld [vmem:[%s1 + $0x78] sm:$0xf]
      %v410 = vld [vmem:[%s1 + $0x7c] sm:$0xf]
      %v411 = vld [vmem:[%s2] sm:$0x1]
      %v413 = vlaneseq
      %v414 = vshrl.u32 %v413, 7
      %v415 = vsub.s32 0, %v414
      %v416 = vrot.slane %v411, %v415
      %v450 = vunpack.c.l.b16 %v379
      %v451 = vunpack.c.l.b16 %v380
      %v452 = vunpack.c.l.b16 %v381
      %v453 = vunpack.c.l.b16 %v382
      %v454 = vunpack.c.l.b16 %v383
      %v455 = vunpack.c.l.b16 %v384
      %v456 = vunpack.c.l.b16 %v385
      %v457 = vunpack.c.l.b16 %v386
      %v458 = vunpack.c.l.b16 %v387
      %v459 = vunpack.c.l.b16 %v388
      %v460 = vunpack.c.l.b16 %v389
      %v461 = vunpack.c.l.b16 %v390
      %v462 = vunpack.c.l.b16 %v391
      %v463 = vunpack.c.l.b16 %v392
      %v464 = vunpack.c.l.b16 %v393
      %v465 = vunpack.c.l.b16 %v394
      %v466 = vunpack.c.l.b16 %v395
      %v467 = vunpack.c.l.b16 %v396
      %v468 = vunpack.c.l.b16 %v397
      %v469 = vunpack.c.l.b16 %v398
      %v470 = vunpack.c.l.b16 %v399
      %v471 = vunpack.c.l.b16 %v400
      %v472 = vunpack.c.l.b16 %v401
      %v473 = vunpack.c.l.b16 %v402
      %v474 = vunpack.c.l.b16 %v403
      %v475 = vunpack.c.l.b16 %v404
      %v476 = vunpack.c.l.b16 %v405
      %v477 = vunpack.c.l.b16 %v406
      %v478 = vunpack.c.l.b16 %v407
      %v479 = vunpack.c.l.b16 %v408
      %v480 = vunpack.c.l.b16 %v409
      %v481 = vunpack.c.l.b16 %v410
      %v482 = vpack.c.b16 %v451, %v450
      %v483 = vpack.c.b16 %v453, %v452
      %v484 = vpack.c.b16 %v455, %v454
      %v485 = vpack.c.b16 %v457, %v456
      %v486 = vpack.c.b16 %v459, %v458
      %v487 = vpack.c.b16 %v461, %v460
      %v488 = vpack.c.b16 %v463, %v462
      %v489 = vpack.c.b16 %v465, %v464
      %v490 = vpack.c.b16 %v467, %v466
      %v491 = vpack.c.b16 %v469, %v468
      %v492 = vpack.c.b16 %v471, %v470
      %v493 = vpack.c.b16 %v473, %v472
      %v494 = vpack.c.b16 %v475, %v474
      %v495 = vpack.c.b16 %v477, %v476
      %v496 = vpack.c.b16 %v479, %v478
      %v497 = vpack.c.b16 %v481, %v480
      %514 = vmatprep.subr.bf16.mxu0 0
      %515 = vmatpush1.bf16.msra.mxu0 %v482
      %516 = vmatprep.subr.bf16.mxu0 0
      %517 = vmatpush1.bf16.msra.mxu0 %v483
      %518 = vmatprep.subr.bf16.mxu0 0
      %519 = vmatpush1.bf16.msra.mxu0 %v484
      %520 = vmatprep.subr.bf16.mxu0 0
      %521 = vmatpush1.bf16.msra.mxu0 %v485
      %522 = vmatprep.subr.bf16.mxu0 0
      %523 = vmatpush1.bf16.msra.mxu0 %v486
      %524 = vmatprep.subr.bf16.mxu0 0
      %525 = vmatpush1.bf16.msra.mxu0 %v487
      %526 = vmatprep.subr.bf16.mxu0 0
      %527 = vmatpush1.bf16.msra.mxu0 %v488
      %528 = vmatprep.subr.bf16.mxu0 0
      %529 = vmatpush1.bf16.msra.mxu0 %v489
      %530 = vmatprep.subr.bf16.mxu0 0
      %531 = vmatpush1.bf16.msra.mxu0 %v490
      %532 = vmatprep.subr.bf16.mxu0 0
      %533 = vmatpush1.bf16.msra.mxu0 %v491
      %534 = vmatprep.subr.bf16.mxu0 0
      %535 = vmatpush1.bf16.msra.mxu0 %v492
      %536 = vmatprep.subr.bf16.mxu0 0
      %537 = vmatpush1.bf16.msra.mxu0 %v493
      %538 = vmatprep.subr.bf16.mxu0 0
      %539 = vmatpush1.bf16.msra.mxu0 %v494
      %540 = vmatprep.subr.bf16.mxu0 0
      %541 = vmatpush1.bf16.msra.mxu0 %v495
      %542 = vmatprep.subr.bf16.mxu0 0
      %543 = vmatpush1.bf16.msra.mxu0 %v496
      %544 = vmatprep.subr.bf16.mxu0 0
      %545 = vmatpush1.bf16.msra.mxu0 %v497
      %546 = vmatprep.mubr.bf16.mxu0 %v364
      %547 = vmatmul.mubr.bf16.gmra.mrb[0].mxu0 %v363
      %v548 = vpop.f32.mrb[0].mxu0
      %v549 = vadd.f32 %v416, %v548
      %v550 = vpop.f32.mrb[0].mxu0
      %v551 = vpop.f32.mrb[0].mxu0
      %v552 = vadd.f32 %v416, %v551
      %v553 = vpop.f32.mrb[0].mxu0
      %554 = vmatprep.mubr.bf16.mxu0 %v366
      %555 = vmatmul.mubr.bf16.gmra.mrb[0].mxu0 %v365
      %v556 = vpop.f32.mrb[0].mxu0
      %v557 = vadd.f32 %v416, %v556
      %v558 = vpop.f32.mrb[0].mxu0
      %v559 = vpop.f32.mrb[0].mxu0
      %v560 = vadd.f32 %v416, %v559
      %v561 = vpop.f32.mrb[0].mxu0
      %562 = vmatprep.mubr.bf16.mxu0 %v368
      %563 = vmatmul.mubr.bf16.gmra.mrb[0].mxu0 %v367
      %v564 = vpop.f32.mrb[0].mxu0
      %v565 = vadd.f32 %v416, %v564
      %v566 = vpop.f32.mrb[0].mxu0
      %v567 = vpop.f32.mrb[0].mxu0
      %v568 = vadd.f32 %v416, %v567
      %v569 = vpop.f32.mrb[0].mxu0
      %570 = vmatprep.mubr.bf16.mxu0 %v370
      %571 = vmatmul.mubr.bf16.gmra.mrb[0].mxu0 %v369
      %v572 = vpop.f32.mrb[0].mxu0
      %v573 = vadd.f32 %v416, %v572
      %v574 = vpop.f32.mrb[0].mxu0
      %v575 = vpop.f32.mrb[0].mxu0
      %v576 = vadd.f32 %v416, %v575
      %v577 = vpop.f32.mrb[0].mxu0
      %578 = vmatprep.mubr.bf16.mxu0 %v372
      %579 = vmatmul.mubr.bf16.gmra.mrb[0].mxu0 %v371
      %v580 = vpop.f32.mrb[0].mxu0
      %v581 = vadd.f32 %v416, %v580
      %v582 = vpop.f32.mrb[0].mxu0
      %v583 = vpop.f32.mrb[0].mxu0
      %v584 = vadd.f32 %v416, %v583
      %v585 = vpop.f32.mrb[0].mxu0
      %586 = vmatprep.mubr.bf16.mxu0 %v374
      %587 = vmatmul.mubr.bf16.gmra.mrb[0].mxu0 %v373
      %v588 = vpop.f32.mrb[0].mxu0
      %v589 = vadd.f32 %v416, %v588
      %v590 = vpop.f32.mrb[0].mxu0
      %v591 = vpop.f32.mrb[0].mxu0
      %v592 = vadd.f32 %v416, %v591
      %v593 = vpop.f32.mrb[0].mxu0
      %594 = vmatprep.mubr.bf16.mxu0 %v376
      %595 = vmatmul.mubr.bf16.gmra.mrb[0].mxu0 %v375
      %v596 = vpop.f32.mrb[0].mxu0
      %v597 = vadd.f32 %v416, %v596
      %v598 = vpop.f32.mrb[0].mxu0
      %v599 = vpop.f32.mrb[0].mxu0
      %v600 = vadd.f32 %v416, %v599
      %v601 = vpop.f32.mrb[0].mxu0
      %602 = vmatprep.mubr.bf16.mxu0 %v378
      %603 = vmatmul.mubr.bf16.gmra.mrb[0].mxu0 %v377
      %v604 = vpop.f32.mrb[0].mxu0
      %v605 = vadd.f32 %v416, %v604
      %v606 = vpop.f32.mrb[0].mxu0
      %v607 = vpop.f32.mrb[0].mxu0
      %v608 = vadd.f32 %v416, %v607
      %v609 = vpop.f32.mrb[0].mxu0
      %610 = vdwg.mxu0
      %v611 = vmax.f32 %v549, 0.0
      %v612 = vmax.f32 %v552, 0.0
      %v613 = vmax.f32 %v557, 0.0
      %v614 = vmax.f32 %v560, 0.0
      %v615 = vmax.f32 %v565, 0.0
      %v616 = vmax.f32 %v568, 0.0
      %v617 = vmax.f32 %v573, 0.0
      %v618 = vmax.f32 %v576, 0.0
      %v619 = vmax.f32 %v581, 0.0
      %v620 = vmax.f32 %v584, 0.0
      %v621 = vmax.f32 %v589, 0.0
      %v622 = vmax.f32 %v592, 0.0
      %v623 = vmax.f32 %v597, 0.0
      %v624 = vmax.f32 %v600, 0.0
      %v625 = vmax.f32 %v605, 0.0
      %v626 = vmax.f32 %v608, 0.0
      %v627 = vlaneseq
      %v628 = vshrl.u32 %v627, 7
      %v629 = vadd.s32 %v628, 8
      %v630 = vadd.s32 %v628, 16
      %v631 = vadd.s32 %v628, 24
      %v632 = vadd.s32 %v628, 32
      %v633 = vadd.s32 %v628, 40
      %v634 = vadd.s32 %v628, 48
      %v635 = vadd.s32 %v628, 56
      %v636 = vadd.s32 %v628, 64
      %v637 = vadd.s32 %v628, 72
      %v638 = vadd.s32 %v628, 80
      %v639 = vadd.s32 %v628, 88
      %v640 = vadd.s32 %v628, 96
      %v641 = vadd.s32 %v628, 104
      %v642 = vadd.s32 %v628, 112
      %v643 = vadd.s32 %v628, 120
      %vm644 = vcmp.lt.s32.totalorder %v628, 0
      %v645 = vsub.s32 0, %v628
      %v646 = vsel %vm644, %v645, %v628
      %v647 = vshrl.u32 %v646, 4
      %v648 = vand.u32 %v646, 15
      %v649 = vsub.s32 0, %v648
      %v650 = vsel %vm644, %v649, %v648
      %vm651 = vcmp.lt.s32.totalorder %v629, 0
      %v652 = vsub.s32 0, %v629
      %v653 = vsel %vm651, %v652, %v629
      %v654 = vshrl.u32 %v653, 4
      %v655 = vand.u32 %v653, 15
      %v656 = vsub.s32 0, %v655
      %v657 = vsel %vm651, %v656, %v655
      %vm658 = vcmp.lt.s32.totalorder %v630, 0
      %v659 = vsub.s32 0, %v630
      %v660 = vsel %vm658, %v659, %v630
      %v661 = vshrl.u32 %v660, 4
      %v662 = vand.u32 %v660, 15
      %v663 = vsub.s32 0, %v662
      %v664 = vsel %vm658, %v663, %v662
      %vm665 = vcmp.lt.s32.totalorder %v631, 0
      %v666 = vsub.s32 0, %v631
      %v667 = vsel %vm665, %v666, %v631
      %v668 = vshrl.u32 %v667, 4
      %v669 = vand.u32 %v667, 15
      %v670 = vsub.s32 0, %v669
      %v671 = vsel %vm665, %v670, %v669
      %vm672 = vcmp.lt.s32.totalorder %v632, 0
      %v673 = vsub.s32 0, %v632
      %v674 = vsel %vm672, %v673, %v632
      %v675 = vshrl.u32 %v674, 4
      %v676 = vand.u32 %v674, 15
      %v677 = vsub.s32 0, %v676
      %v678 = vsel %vm672, %v677, %v676
      %vm679 = vcmp.lt.s32.totalorder %v633, 0
      %v680 = vsub.s32 0, %v633
      %v681 = vsel %vm679, %v680, %v633
      %v682 = vshrl.u32 %v681, 4
      %v683 = vand.u32 %v681, 15
      %v684 = vsub.s32 0, %v683
      %v685 = vsel %vm679, %v684, %v683
      %vm686 = vcmp.lt.s32.totalorder %v634, 0
      %v687 = vsub.s32 0, %v634
      %v688 = vsel %vm686, %v687, %v634
      %v689 = vshrl.u32 %v688, 4
      %v690 = vand.u32 %v688, 15
      %v691 = vsub.s32 0, %v690
      %v692 = vsel %vm686, %v691, %v690
      %vm693 = vcmp.lt.s32.totalorder %v635, 0
      %v694 = vsub.s32 0, %v635
      %v695 = vsel %vm693, %v694, %v635
      %v696 = vshrl.u32 %v695, 4
      %v697 = vand.u32 %v695, 15
      %v698 = vsub.s32 0, %v697
      %v699 = vsel %vm693, %v698, %v697
      %vm700 = vcmp.lt.s32.totalorder %v636, 0
      %v701 = vsub.s32 0, %v636
      %v702 = vsel %vm700, %v701, %v636
      %v703 = vshrl.u32 %v702, 4
      %v704 = vand.u32 %v702, 15
      %v705 = vsub.s32 0, %v704
      %v706 = vsel %vm700, %v705, %v704
      %vm707 = vcmp.lt.s32.totalorder %v637, 0
      %v708 = vsub.s32 0, %v637
      %v709 = vsel %vm707, %v708, %v637
      %v710 = vshrl.u32 %v709, 4
      %v711 = vand.u32 %v709, 15
      %v712 = vsub.s32 0, %v711
      %v713 = vsel %vm707, %v712, %v711
      %vm714 = vcmp.lt.s32.totalorder %v638, 0
      %v715 = vsub.s32 0, %v638
      %v716 = vsel %vm714, %v715, %v638
      %v717 = vshrl.u32 %v716, 4
      %v718 = vand.u32 %v716, 15
      %v719 = vsub.s32 0, %v718
      %v720 = vsel %vm714, %v719, %v718
      %vm721 = vcmp.lt.s32.totalorder %v639, 0
      %v722 = vsub.s32 0, %v639
      %v723 = vsel %vm721, %v722, %v639
      %v724 = vshrl.u32 %v723, 4
      %v725 = vand.u32 %v723, 15
      %v726 = vsub.s32 0, %v725
      %v727 = vsel %vm721, %v726, %v725
      %vm728 = vcmp.lt.s32.totalorder %v640, 0
      %v729 = vsub.s32 0, %v640
      %v730 = vsel %vm728, %v729, %v640
      %v731 = vshrl.u32 %v730, 4
      %v732 = vand.u32 %v730, 15
      %v733 = vsub.s32 0, %v732
      %v734 = vsel %vm728, %v733, %v732
      %vm735 = vcmp.lt.s32.totalorder %v641, 0
      %v736 = vsub.s32 0, %v641
      %v737 = vsel %vm735, %v736, %v641
      %v738 = vshrl.u32 %v737, 4
      %v739 = vand.u32 %v737, 15
      %v740 = vsub.s32 0, %v739
      %v741 = vsel %vm735, %v740, %v739
      %vm742 = vcmp.lt.s32.totalorder %v642, 0
      %v743 = vsub.s32 0, %v642
      %v744 = vsel %vm742, %v743, %v642
      %v745 = vshrl.u32 %v744, 4
      %v746 = vand.u32 %v744, 15
      %v747 = vsub.s32 0, %v746
      %v748 = vsel %vm742, %v747, %v746
      %vm749 = vcmp.lt.s32.totalorder %v643, 0
      %v750 = vsub.s32 0, %v643
      %v751 = vsel %vm749, %v750, %v643
      %v752 = vshrl.u32 %v751, 4
      %v753 = vand.u32 %v751, 15
      %v754 = vsub.s32 0, %v753
      %v755 = vsel %vm749, %v754, %v753
      %vm756 = vcmp.ne.s32.totalorder %v650, 0
      %vm757 = vcmp.ne.s32.totalorder %v657, 0
      %vm758 = vcmp.ne.s32.totalorder %v664, 0
      %vm759 = vcmp.ne.s32.totalorder %v671, 0
      %vm760 = vcmp.ne.s32.totalorder %v678, 0
      %vm761 = vcmp.ne.s32.totalorder %v685, 0
      %vm762 = vcmp.ne.s32.totalorder %v692, 0
      %vm763 = vcmp.ne.s32.totalorder %v699, 0
      %vm764 = vcmp.ne.s32.totalorder %v706, 0
      %vm765 = vcmp.ne.s32.totalorder %v713, 0
      %vm766 = vcmp.ne.s32.totalorder %v720, 0
      %vm767 = vcmp.ne.s32.totalorder %v727, 0
      %vm768 = vcmp.ne.s32.totalorder %v734, 0
      %vm769 = vcmp.ne.s32.totalorder %v741, 0
      %vm770 = vcmp.ne.s32.totalorder %v748, 0
      %vm771 = vcmp.ne.s32.totalorder %v755, 0
      %vm772 = vcmp.lt.s32.totalorder %v650, 0
      %vm773 = vcmp.lt.s32.totalorder %v657, 0
      %vm774 = vcmp.lt.s32.totalorder %v664, 0
      %vm775 = vcmp.lt.s32.totalorder %v671, 0
      %vm776 = vcmp.lt.s32.totalorder %v678, 0
      %vm777 = vcmp.lt.s32.totalorder %v685, 0
      %vm778 = vcmp.lt.s32.totalorder %v692, 0
      %vm779 = vcmp.lt.s32.totalorder %v699, 0
      %vm780 = vcmp.lt.s32.totalorder %v706, 0
      %vm781 = vcmp.lt.s32.totalorder %v713, 0
      %vm782 = vcmp.lt.s32.totalorder %v720, 0
      %vm783 = vcmp.lt.s32.totalorder %v727, 0
      %vm784 = vcmp.lt.s32.totalorder %v734, 0
      %vm785 = vcmp.lt.s32.totalorder %v741, 0
      %vm786 = vcmp.lt.s32.totalorder %v748, 0
      %vm787 = vcmp.lt.s32.totalorder %v755, 0
      %vm788 = vmand %vm772, %vm756
      %vm789 = vmand %vm773, %vm757
      %vm790 = vmand %vm774, %vm758
      %vm791 = vmand %vm775, %vm759
      %vm792 = vmand %vm776, %vm760
      %vm793 = vmand %vm777, %vm761
      %vm794 = vmand %vm778, %vm762
      %vm795 = vmand %vm779, %vm763
      %vm796 = vmand %vm780, %vm764
      %vm797 = vmand %vm781, %vm765
      %vm798 = vmand %vm782, %vm766
      %vm799 = vmand %vm783, %vm767
      %vm800 = vmand %vm784, %vm768
      %vm801 = vmand %vm785, %vm769
      %vm802 = vmand %vm786, %vm770
      %vm803 = vmand %vm787, %vm771
      %v804 = vadd.s32 %v650, 16
      %v805 = vadd.s32 %v657, 16
      %v806 = vadd.s32 %v664, 16
      %v807 = vadd.s32 %v671, 16
      %v808 = vadd.s32 %v678, 16
      %v809 = vadd.s32 %v685, 16
      %v810 = vadd.s32 %v692, 16
      %v811 = vadd.s32 %v699, 16
      %v812 = vadd.s32 %v706, 16
      %v813 = vadd.s32 %v713, 16
      %v814 = vadd.s32 %v720, 16
      %v815 = vadd.s32 %v727, 16
      %v816 = vadd.s32 %v734, 16
      %v817 = vadd.s32 %v741, 16
      %v818 = vadd.s32 %v748, 16
      %v819 = vadd.s32 %v755, 16
      %v820 = vsel %vm788, %v804, %v650
      %v821 = vsel %vm789, %v805, %v657
      %v822 = vsel %vm790, %v806, %v664
      %v823 = vsel %vm791, %v807, %v671
      %v824 = vsel %vm792, %v808, %v678
      %v825 = vsel %vm793, %v809, %v685
      %v826 = vsel %vm794, %v810, %v692
      %v827 = vsel %vm795, %v811, %v699
      %v828 = vsel %vm796, %v812, %v706
      %v829 = vsel %vm797, %v813, %v713
      %v830 = vsel %vm798, %v814, %v720
      %v831 = vsel %vm799, %v815, %v727
      %v832 = vsel %vm800, %v816, %v734
      %v833 = vsel %vm801, %v817, %v741
      %v834 = vsel %vm802, %v818, %v748
      %v835 = vsel %vm803, %v819, %v755
      %vm836 = vcmp.eq.s32.totalorder %v820, 0
      %vm837 = vcmp.eq.s32.totalorder %v821, 0
      %vm838 = vcmp.eq.s32.totalorder %v822, 0
      %vm839 = vcmp.eq.s32.totalorder %v823, 0
      %vm840 = vcmp.eq.s32.totalorder %v824, 0
      %vm841 = vcmp.eq.s32.totalorder %v825, 0
      %vm842 = vcmp.eq.s32.totalorder %v826, 0
      %vm843 = vcmp.eq.s32.totalorder %v827, 0
      %vm844 = vcmp.eq.s32.totalorder %v828, 0
      %vm845 = vcmp.eq.s32.totalorder %v829, 0
      %vm846 = vcmp.eq.s32.totalorder %v830, 0
      %vm847 = vcmp.eq.s32.totalorder %v831, 0
      %vm848 = vcmp.eq.s32.totalorder %v832, 0
      %vm849 = vcmp.eq.s32.totalorder %v833, 0
      %vm850 = vcmp.eq.s32.totalorder %v834, 0
      %vm851 = vcmp.eq.s32.totalorder %v835, 0
      %v852 = vrot.slane %v611, 7
      %v853 = vrot.slane %v612, 7
      %v854 = vrot.slane %v613, 7
      %v855 = vrot.slane %v614, 7
      %v856 = vrot.slane %v615, 7
      %v857 = vrot.slane %v616, 7
      %v858 = vrot.slane %v617, 7
      %v859 = vrot.slane %v618, 7
      %v860 = vrot.slane %v619, 7
      %v861 = vrot.slane %v620, 7
      %v862 = vrot.slane %v621, 7
      %v863 = vrot.slane %v622, 7
      %v864 = vrot.slane %v623, 7
      %v865 = vrot.slane %v624, 7
      %v866 = vrot.slane %v625, 7
      %v867 = vrot.slane %v626, 7
      %vm868 = vcmp.lt.s32.totalorder %v628, 1
      %v869 = vsel %vm868, %v866, %v867
      %v870 = vsel %vm868, %v865, %v866
      %v871 = vsel %vm868, %v864, %v865
      %v872 = vsel %vm868, %v863, %v864
      %v873 = vsel %vm868, %v862, %v863
      %v874 = vsel %vm868, %v861, %v862
      %v875 = vsel %vm868, %v860, %v861
      %v876 = vsel %vm868, %v859, %v860
      %v877 = vsel %vm868, %v858, %v859
      %v878 = vsel %vm868, %v857, %v858
      %v879 = vsel %vm868, %v856, %v857
      %v880 = vsel %vm868, %v855, %v856
      %v881 = vsel %vm868, %v854, %v855
      %v882 = vsel %vm868, %v853, %v854
      %v883 = vsel %vm868, %v852, %v853
      %v884 = vsel %vm868, %v867, %v852
      %v885 = vsel %vm836, 1, 0
      %v886 = vsel %vm837, 1, 0
      %v887 = vsel %vm838, 1, 0
      %v888 = vsel %vm839, 1, 0
      %v889 = vsel %vm840, 1, 0
      %v890 = vsel %vm841, 1, 0
      %v891 = vsel %vm842, 1, 0
      %v892 = vsel %vm843, 1, 0
      %v893 = vsel %vm844, 1, 0
      %v894 = vsel %vm845, 1, 0
      %v895 = vsel %vm846, 1, 0
      %v896 = vsel %vm847, 1, 0
      %v897 = vsel %vm848, 1, 0
      %v898 = vsel %vm849, 1, 0
      %v899 = vsel %vm850, 1, 0
      %v900 = vsel %vm851, 1, 0
      %vm901 = vcmp.eq.s32.totalorder %v885, 1
      %vm902 = vcmp.eq.s32.totalorder %v886, 1
      %vm903 = vcmp.eq.s32.totalorder %v887, 1
      %vm904 = vcmp.eq.s32.totalorder %v888, 1
      %vm905 = vcmp.eq.s32.totalorder %v889, 1
      %vm906 = vcmp.eq.s32.totalorder %v890, 1
      %vm907 = vcmp.eq.s32.totalorder %v891, 1
      %vm908 = vcmp.eq.s32.totalorder %v892, 1
      %vm909 = vcmp.eq.s32.totalorder %v893, 1
      %vm910 = vcmp.eq.s32.totalorder %v894, 1
      %vm911 = vcmp.eq.s32.totalorder %v895, 1
      %vm912 = vcmp.eq.s32.totalorder %v896, 1
      %vm913 = vcmp.eq.s32.totalorder %v897, 1
      %vm914 = vcmp.eq.s32.totalorder %v898, 1
      %vm915 = vcmp.eq.s32.totalorder %v899, 1
      %vm916 = vcmp.eq.s32.totalorder %v900, 1
      %v917 = vsel %vm901, 0.0, %v884
      %v918 = vsel %vm902, 0.0, %v883
      %v919 = vsel %vm903, 0.0, %v882
      %v920 = vsel %vm904, 0.0, %v881
      %v921 = vsel %vm905, 0.0, %v880
      %v922 = vsel %vm906, 0.0, %v879
      %v923 = vsel %vm907, 0.0, %v878
      %v924 = vsel %vm908, 0.0, %v877
      %v925 = vsel %vm909, 0.0, %v876
      %v926 = vsel %vm910, 0.0, %v875
      %v927 = vsel %vm911, 0.0, %v874
      %v928 = vsel %vm912, 0.0, %v873
      %v929 = vsel %vm913, 0.0, %v872
      %v930 = vsel %vm914, 0.0, %v871
      %v931 = vsel %vm915, 0.0, %v870
      %v932 = vsel %vm916, 0.0, %v869
      %vm933 = vcmp.eq.s32.totalorder %v820, 15
      %vm934 = vcmp.eq.s32.totalorder %v821, 15
      %vm935 = vcmp.eq.s32.totalorder %v822, 15
      %vm936 = vcmp.eq.s32.totalorder %v823, 15
      %vm937 = vcmp.eq.s32.totalorder %v824, 15
      %vm938 = vcmp.eq.s32.totalorder %v825, 15
      %vm939 = vcmp.eq.s32.totalorder %v826, 15
      %vm940 = vcmp.eq.s32.totalorder %v827, 15
      %vm941 = vcmp.eq.s32.totalorder %v828, 15
      %vm942 = vcmp.eq.s32.totalorder %v829, 15
      %vm943 = vcmp.eq.s32.totalorder %v830, 15
      %vm944 = vcmp.eq.s32.totalorder %v831, 15
      %vm945 = vcmp.eq.s32.totalorder %v832, 15
      %vm946 = vcmp.eq.s32.totalorder %v833, 15
      %vm947 = vcmp.eq.s32.totalorder %v834, 15
      %vm948 = vcmp.eq.s32.totalorder %v835, 15
      %v949 = vrot.slane %v611, 1
      %v950 = vrot.slane %v612, 1
      %v951 = vrot.slane %v613, 1
      %v952 = vrot.slane %v614, 1
      %v953 = vrot.slane %v615, 1
      %v954 = vrot.slane %v616, 1
      %v955 = vrot.slane %v617, 1
      %v956 = vrot.slane %v618, 1
      %v957 = vrot.slane %v619, 1
      %v958 = vrot.slane %v620, 1
      %v959 = vrot.slane %v621, 1
      %v960 = vrot.slane %v622, 1
      %v961 = vrot.slane %v623, 1
      %v962 = vrot.slane %v624, 1
      %v963 = vrot.slane %v625, 1
      %v964 = vrot.slane %v626, 1
      %vm965 = vcmp.lt.s32.totalorder %v628, 7
      %v966 = vsel %vm965, %v963, %v964
      %v967 = vsel %vm965, %v962, %v963
      %v968 = vsel %vm965, %v961, %v962
      %v969 = vsel %vm965, %v960, %v961
      %v970 = vsel %vm965, %v959, %v960
      %v971 = vsel %vm965, %v958, %v959
      %v972 = vsel %vm965, %v957, %v958
      %v973 = vsel %vm965, %v956, %v957
      %v974 = vsel %vm965, %v955, %v956
      %v975 = vsel %vm965, %v954, %v955
      %v976 = vsel %vm965, %v953, %v954
      %v977 = vsel %vm965, %v952, %v953
      %v978 = vsel %vm965, %v951, %v952
      %v979 = vsel %vm965, %v950, %v951
      %v980 = vsel %vm965, %v949, %v950
      %v981 = vsel %vm965, %v964, %v949
      %v982 = vsel %vm933, 1, 0
      %v983 = vsel %vm934, 1, 0
      %v984 = vsel %vm935, 1, 0
      %v985 = vsel %vm936, 1, 0
      %v986 = vsel %vm937, 1, 0
      %v987 = vsel %vm938, 1, 0
      %v988 = vsel %vm939, 1, 0
      %v989 = vsel %vm940, 1, 0
      %v990 = vsel %vm941, 1, 0
      %v991 = vsel %vm942, 1, 0
      %v992 = vsel %vm943, 1, 0
      %v993 = vsel %vm944, 1, 0
      %v994 = vsel %vm945, 1, 0
      %v995 = vsel %vm946, 1, 0
      %v996 = vsel %vm947, 1, 0
      %v997 = vsel %vm948, 1, 0
      %vm998 = vcmp.eq.s32.totalorder %v982, 1
      %vm999 = vcmp.eq.s32.totalorder %v983, 1
      %vm1000 = vcmp.eq.s32.totalorder %v984, 1
      %vm1001 = vcmp.eq.s32.totalorder %v985, 1
      %vm1002 = vcmp.eq.s32.totalorder %v986, 1
      %vm1003 = vcmp.eq.s32.totalorder %v987, 1
      %vm1004 = vcmp.eq.s32.totalorder %v988, 1
      %vm1005 = vcmp.eq.s32.totalorder %v989, 1
      %vm1006 = vcmp.eq.s32.totalorder %v990, 1
      %vm1007 = vcmp.eq.s32.totalorder %v991, 1
      %vm1008 = vcmp.eq.s32.totalorder %v992, 1
      %vm1009 = vcmp.eq.s32.totalorder %v993, 1
      %vm1010 = vcmp.eq.s32.totalorder %v994, 1
      %vm1011 = vcmp.eq.s32.totalorder %v995, 1
      %vm1012 = vcmp.eq.s32.totalorder %v996, 1
      %vm1013 = vcmp.eq.s32.totalorder %v997, 1
      %v1014 = vsel %vm998, 0.0, %v980
      %v1015 = vsel %vm999, 0.0, %v979
      %v1016 = vsel %vm1000, 0.0, %v978
      %v1017 = vsel %vm1001, 0.0, %v977
      %v1018 = vsel %vm1002, 0.0, %v976
      %v1019 = vsel %vm1003, 0.0, %v975
      %v1020 = vsel %vm1004, 0.0, %v974
      %v1021 = vsel %vm1005, 0.0, %v973
      %v1022 = vsel %vm1006, 0.0, %v972
      %v1023 = vsel %vm1007, 0.0, %v971
      %v1024 = vsel %vm1008, 0.0, %v970
      %v1025 = vsel %vm1009, 0.0, %v969
      %v1026 = vsel %vm1010, 0.0, %v968
      %v1027 = vsel %vm1011, 0.0, %v967
      %v1028 = vsel %vm1012, 0.0, %v966
      %v1029 = vsel %vm1013, 0.0, %v981
      %1046 = vrot.lane.b32.xlu0 %v611, 64
      %v1047 = vpop.permute.xlu0 %1046
      %1048 = vrot.lane.b32.xlu0 %v612, 64
      %v1049 = vpop.permute.xlu0 %1048
      %1050 = vrot.lane.b32.xlu0 %v613, 64
      %v1051 = vpop.permute.xlu0 %1050
      %1052 = vrot.lane.b32.xlu0 %v614, 64
      %v1053 = vpop.permute.xlu0 %1052
      %1054 = vrot.lane.b32.xlu0 %v615, 64
      %v1055 = vpop.permute.xlu0 %1054
      %1056 = vrot.lane.b32.xlu0 %v616, 64
      %v1057 = vpop.permute.xlu0 %1056
      %1058 = vrot.lane.b32.xlu0 %v617, 64
      %v1059 = vpop.permute.xlu0 %1058
      %1060 = vrot.lane.b32.xlu0 %v618, 64
      %v1061 = vpop.permute.xlu0 %1060
      %1062 = vrot.lane.b32.xlu0 %v619, 64
      %v1063 = vpop.permute.xlu0 %1062
      %1064 = vrot.lane.b32.xlu0 %v620, 64
      %v1065 = vpop.permute.xlu0 %1064
      %1066 = vrot.lane.b32.xlu0 %v621, 64
      %v1067 = vpop.permute.xlu0 %1066
      %1068 = vrot.lane.b32.xlu0 %v622, 64
      %v1069 = vpop.permute.xlu0 %1068
      %1070 = vrot.lane.b32.xlu0 %v623, 64
      %v1071 = vpop.permute.xlu0 %1070
      %1072 = vrot.lane.b32.xlu0 %v624, 64
      %v1073 = vpop.permute.xlu0 %1072
      %1074 = vrot.lane.b32.xlu0 %v625, 64
      %v1075 = vpop.permute.xlu0 %1074
      %1076 = vrot.lane.b32.xlu0 %v626, 64
      %v1077 = vpop.permute.xlu0 %1076
      %vm1094 = vcmask 523264
      %v1095 = vsel %vm1094, %v917, %v1047
      %v1096 = vsel %vm1094, %v918, %v1049
      %v1097 = vsel %vm1094, %v919, %v1051
      %v1098 = vsel %vm1094, %v920, %v1053
      %v1099 = vsel %vm1094, %v921, %v1055
      %v1100 = vsel %vm1094, %v922, %v1057
      %v1101 = vsel %vm1094, %v923, %v1059
      %v1102 = vsel %vm1094, %v924, %v1061
      %v1103 = vsel %vm1094, %v925, %v1063
      %v1104 = vsel %vm1094, %v926, %v1065
      %v1105 = vsel %vm1094, %v927, %v1067
      %v1106 = vsel %vm1094, %v928, %v1069
      %v1107 = vsel %vm1094, %v929, %v1071
      %v1108 = vsel %vm1094, %v930, %v1073
      %v1109 = vsel %vm1094, %v931, %v1075
      %v1110 = vsel %vm1094, %v932, %v1077
      %v1111 = vpack.c.bf16 %v1096, %v1095
      %v1112 = vpack.c.bf16 %v1015, %v1014
      %v1113 = vpack.c.bf16 %v1098, %v1097
      %v1114 = vpack.c.bf16 %v1017, %v1016
      %v1115 = vpack.c.bf16 %v1100, %v1099
      %v1116 = vpack.c.bf16 %v1019, %v1018
      %v1117 = vpack.c.bf16 %v1102, %v1101
      %v1118 = vpack.c.bf16 %v1021, %v1020
      %v1119 = vpack.c.bf16 %v1104, %v1103
      %v1120 = vpack.c.bf16 %v1023, %v1022
      %v1121 = vpack.c.bf16 %v1106, %v1105
      %v1122 = vpack.c.bf16 %v1025, %v1024
      %v1123 = vpack.c.bf16 %v1108, %v1107
      %v1124 = vpack.c.bf16 %v1027, %v1026
      %v1125 = vpack.c.bf16 %v1110, %v1109
      %v1126 = vpack.c.bf16 %v1029, %v1028
      %v1127 = vld [vmem:[%s3] sm:$0xf]
      %v1128 = vld [vmem:[%s3 + $0x4] sm:$0xf]
      %v1129 = vld [vmem:[%s3 + $0x8] sm:$0xf]
      %v1130 = vld [vmem:[%s3 + $0xc] sm:$0xf]
      %v1131 = vld [vmem:[%s3 + $0x10] sm:$0xf]
      %v1132 = vld [vmem:[%s3 + $0x14] sm:$0xf]
      %v1133 = vld [vmem:[%s3 + $0x18] sm:$0xf]
      %v1134 = vld [vmem:[%s3 + $0x1c] sm:$0xf]
      %v1135 = vld [vmem:[%s3 + $0x20] sm:$0xf]
      %v1136 = vld [vmem:[%s3 + $0x24] sm:$0xf]
      %v1137 = vld [vmem:[%s3 + $0x28] sm:$0xf]
      %v1138 = vld [vmem:[%s3 + $0x2c] sm:$0xf]
      %v1139 = vld [vmem:[%s3 + $0x30] sm:$0xf]
      %v1140 = vld [vmem:[%s3 + $0x34] sm:$0xf]
      %v1141 = vld [vmem:[%s3 + $0x38] sm:$0xf]
      %v1142 = vld [vmem:[%s3 + $0x3c] sm:$0xf]
      %v1143 = vld [vmem:[%s3 + $0x40] sm:$0xf]
      %v1144 = vld [vmem:[%s3 + $0x44] sm:$0xf]
      %v1145 = vld [vmem:[%s3 + $0x48] sm:$0xf]
      %v1146 = vld [vmem:[%s3 + $0x4c] sm:$0xf]
      %v1147 = vld [vmem:[%s3 + $0x50] sm:$0xf]
      %v1148 = vld [vmem:[%s3 + $0x54] sm:$0xf]
      %v1149 = vld [vmem:[%s3 + $0x58] sm:$0xf]
      %v1150 = vld [vmem:[%s3 + $0x5c] sm:$0xf]
      %v1151 = vld [vmem:[%s4] sm:$0x1]
      %v1153 = vlaneseq
      %v1154 = vshrl.u32 %v1153, 7
      %v1155 = vsub.s32 0, %v1154
      %v1156 = vrot.slane %v1151, %v1155
      %v1182 = vunpack.c.l.b16 %v1127
      %v1183 = vunpack.c.l.b16 %v1128
      %v1184 = vunpack.c.l.b16 %v1129
      %v1185 = vunpack.c.l.b16 %v1130
      %v1186 = vunpack.c.l.b16 %v1131
      %v1187 = vunpack.c.l.b16 %v1132
      %v1188 = vunpack.c.l.b16 %v1133
      %v1189 = vunpack.c.l.b16 %v1134
      %v1190 = vunpack.c.l.b16 %v1135
      %v1191 = vunpack.c.l.b16 %v1136
      %v1192 = vunpack.c.l.b16 %v1137
      %v1193 = vunpack.c.l.b16 %v1138
      %v1194 = vunpack.c.l.b16 %v1139
      %v1195 = vunpack.c.l.b16 %v1140
      %v1196 = vunpack.c.l.b16 %v1141
      %v1197 = vunpack.c.l.b16 %v1142
      %v1198 = vunpack.c.l.b16 %v1143
      %v1199 = vunpack.c.l.b16 %v1144
      %v1200 = vunpack.c.l.b16 %v1145
      %v1201 = vunpack.c.l.b16 %v1146
      %v1202 = vunpack.c.l.b16 %v1147
      %v1203 = vunpack.c.l.b16 %v1148
      %v1204 = vunpack.c.l.b16 %v1149
      %v1205 = vunpack.c.l.b16 %v1150
      %v1206 = vpack.c.b16 %v1183, %v1182
      %v1207 = vpack.c.b16 %v1185, %v1184
      %v1208 = vpack.c.b16 %v1187, %v1186
      %v1209 = vpack.c.b16 %v1189, %v1188
      %v1210 = vpack.c.b16 %v1191, %v1190
      %v1211 = vpack.c.b16 %v1193, %v1192
      %v1212 = vpack.c.b16 %v1195, %v1194
      %v1213 = vpack.c.b16 %v1197, %v1196
      %v1214 = vpack.c.b16 %v1199, %v1198
      %v1215 = vpack.c.b16 %v1201, %v1200
      %v1216 = vpack.c.b16 %v1203, %v1202
      %v1217 = vpack.c.b16 %v1205, %v1204
      %v1231 = vsel %vm1094, %v1112, 0
      %v1234 = vsel %vm1094, %v1114, 0
      %v1237 = vsel %vm1094, %v1116, 0
      %v1240 = vsel %vm1094, %v1118, 0
      %v1243 = vsel %vm1094, %v1120, 0
      %v1246 = vsel %vm1094, %v1122, 0
      %v1249 = vsel %vm1094, %v1124, 0
      %v1252 = vsel %vm1094, %v1126, 0
      %1254 = vmatprep.subr.bf16.mxu0 0
      %1255 = vmatpush1.bf16.msra.mxu0 %v1206
      %1256 = vmatprep.subr.bf16.mxu0 0
      %1257 = vmatpush1.bf16.msra.mxu0 %v1207
      %1258 = vmatprep.subr.bf16.mxu0 0
      %1259 = vmatpush1.bf16.msra.mxu0 %v1208
      %1260 = vmatprep.subr.bf16.mxu0 0
      %1261 = vmatpush1.bf16.msra.mxu0 %v1209
      %1262 = vmatprep.subr.bf16.mxu0 0
      %1263 = vmatpush1.bf16.msra.mxu0 %v1210
      %1264 = vmatprep.subr.bf16.mxu0 0
      %1265 = vmatpush1.bf16.msra.mxu0 %v1211
      %1266 = vmatprep.subr.bf16.mxu0 0
      %1267 = vmatpush1.bf16.msra.mxu0 %v1212
      %1268 = vmatprep.subr.bf16.mxu0 0
      %1269 = vmatpush1.bf16.msra.mxu0 %v1213
      %1270 = vmatprep.subr.bf16.mxu0 0
      %1271 = vmatpush1.bf16.msra.mxu0 %v1214
      %1272 = vmatprep.subr.bf16.mxu0 0
      %1273 = vmatpush1.bf16.msra.mxu0 %v1215
      %1274 = vmatprep.subr.bf16.mxu0 0
      %1275 = vmatpush1.bf16.msra.mxu0 %v1216
      %1276 = vmatprep.subr.bf16.mxu0 0
      %1277 = vmatpush1.bf16.msra.mxu0 %v1217
      %1278 = vmatprep.subr.bf16.mxu0 0
      %1279 = vmatpush1.bf16.msra.mxu0 0
      %1280 = vmatprep.subr.bf16.mxu0 0
      %1281 = vmatpush1.bf16.msra.mxu0 0
      %1282 = vmatprep.subr.bf16.mxu0 0
      %1283 = vmatpush1.bf16.msra.mxu0 0
      %1284 = vmatprep.subr.bf16.mxu0 0
      %1285 = vmatpush1.bf16.msra.mxu0 0
      %1286 = vmatprep.mubr.bf16.mxu0 %v1231
      %1287 = vmatmul.mubr.bf16.gmra.mrb[0].mxu0 %v1111
      %v1288 = vpop.f32.mrb[0].mxu0
      %v1289 = vadd.f32 %v1156, %v1288
      %v1290 = vpop.f32.mrb[0].mxu0
      %v1291 = vpop.f32.mrb[0].mxu0
      %v1292 = vadd.f32 %v1156, %v1291
      %v1293 = vpop.f32.mrb[0].mxu0
      %1294 = vmatprep.mubr.bf16.mxu0 %v1234
      %1295 = vmatmul.mubr.bf16.gmra.mrb[0].mxu0 %v1113
      %v1296 = vpop.f32.mrb[0].mxu0
      %v1297 = vadd.f32 %v1156, %v1296
      %v1298 = vpop.f32.mrb[0].mxu0
      %v1299 = vpop.f32.mrb[0].mxu0
      %v1300 = vadd.f32 %v1156, %v1299
      %v1301 = vpop.f32.mrb[0].mxu0
      %1302 = vmatprep.mubr.bf16.mxu0 %v1237
      %1303 = vmatmul.mubr.bf16.gmra.mrb[0].mxu0 %v1115
      %v1304 = vpop.f32.mrb[0].mxu0
      %v1305 = vadd.f32 %v1156, %v1304
      %v1306 = vpop.f32.mrb[0].mxu0
      %v1307 = vpop.f32.mrb[0].mxu0
      %v1308 = vadd.f32 %v1156, %v1307
      %v1309 = vpop.f32.mrb[0].mxu0
      %1310 = vmatprep.mubr.bf16.mxu0 %v1240
      %1311 = vmatmul.mubr.bf16.gmra.mrb[0].mxu0 %v1117
      %v1312 = vpop.f32.mrb[0].mxu0
      %v1313 = vadd.f32 %v1156, %v1312
      %v1314 = vpop.f32.mrb[0].mxu0
      %v1315 = vpop.f32.mrb[0].mxu0
      %v1316 = vadd.f32 %v1156, %v1315
      %v1317 = vpop.f32.mrb[0].mxu0
      %1318 = vmatprep.mubr.bf16.mxu0 %v1243
      %1319 = vmatmul.mubr.bf16.gmra.mrb[0].mxu0 %v1119
      %v1320 = vpop.f32.mrb[0].mxu0
      %v1321 = vadd.f32 %v1156, %v1320
      %v1322 = vpop.f32.mrb[0].mxu0
      %v1323 = vpop.f32.mrb[0].mxu0
      %v1324 = vadd.f32 %v1156, %v1323
      %v1325 = vpop.f32.mrb[0].mxu0
      %1326 = vmatprep.mubr.bf16.mxu0 %v1246
      %1327 = vmatmul.mubr.bf16.gmra.mrb[0].mxu0 %v1121
      %v1328 = vpop.f32.mrb[0].mxu0
      %v1329 = vadd.f32 %v1156, %v1328
      %v1330 = vpop.f32.mrb[0].mxu0
      %v1331 = vpop.f32.mrb[0].mxu0
      %v1332 = vadd.f32 %v1156, %v1331
      %v1333 = vpop.f32.mrb[0].mxu0
      %1334 = vmatprep.mubr.bf16.mxu0 %v1249
      %1335 = vmatmul.mubr.bf16.gmra.mrb[0].mxu0 %v1123
      %v1336 = vpop.f32.mrb[0].mxu0
      %v1337 = vadd.f32 %v1156, %v1336
      %v1338 = vpop.f32.mrb[0].mxu0
      %v1339 = vpop.f32.mrb[0].mxu0
      %v1340 = vadd.f32 %v1156, %v1339
      %v1341 = vpop.f32.mrb[0].mxu0
      %1342 = vmatprep.mubr.bf16.mxu0 %v1252
      %1343 = vmatmul.mubr.bf16.gmra.mrb[0].mxu0 %v1125
      %v1344 = vpop.f32.mrb[0].mxu0
      %v1345 = vadd.f32 %v1156, %v1344
      %v1346 = vpop.f32.mrb[0].mxu0
      %v1347 = vpop.f32.mrb[0].mxu0
      %v1348 = vadd.f32 %v1156, %v1347
      %v1349 = vpop.f32.mrb[0].mxu0
      %1350 = vdwg.mxu0
      %v1351 = vmax.f32 %v1289, 0.0
      %v1352 = vmax.f32 %v1292, 0.0
      %v1353 = vmax.f32 %v1297, 0.0
      %v1354 = vmax.f32 %v1300, 0.0
      %v1355 = vmax.f32 %v1305, 0.0
      %v1356 = vmax.f32 %v1308, 0.0
      %v1357 = vmax.f32 %v1313, 0.0
      %v1358 = vmax.f32 %v1316, 0.0
      %v1359 = vmax.f32 %v1321, 0.0
      %v1360 = vmax.f32 %v1324, 0.0
      %v1361 = vmax.f32 %v1329, 0.0
      %v1362 = vmax.f32 %v1332, 0.0
      %v1363 = vmax.f32 %v1337, 0.0
      %v1364 = vmax.f32 %v1340, 0.0
      %v1365 = vmax.f32 %v1345, 0.0
      %v1366 = vmax.f32 %v1348, 0.0
      %v1367 = vpack.c.bf16 %v1352, %v1351
      %v1368 = vpack.c.bf16 %v1354, %v1353
      %v1369 = vpack.c.bf16 %v1356, %v1355
      %v1370 = vpack.c.bf16 %v1358, %v1357
      %v1371 = vpack.c.bf16 %v1360, %v1359
      %v1372 = vpack.c.bf16 %v1362, %v1361
      %v1373 = vpack.c.bf16 %v1364, %v1363
      %v1374 = vpack.c.bf16 %v1366, %v1365
      %v1375 = vld [vmem:[%s5] sm:$0xff]
      %v1376 = vld [vmem:[%s5 + $0x8] sm:$0xff]
      %v1377 = vld [vmem:[%s5 + $0x10] sm:$0xff]
      %v1378 = vld [vmem:[%s5 + $0x18] sm:$0xff]
      %v1379 = vld [vmem:[%s5 + $0x20] sm:$0xff]
      %v1380 = vld [vmem:[%s5 + $0x28] sm:$0xff]
      %v1381 = vld [vmem:[%s5 + $0x30] sm:$0xff]
      %v1382 = vld [vmem:[%s5 + $0x38] sm:$0xff]
      %v1383 = vld [vmem:[%s6] sm:$0x3]
      %v1385 = vlaneseq
      %v1386 = vshrl.u32 %v1385, 7
      %v1387 = vsub.s32 0, %v1386
      %v1388 = vrot.slane %v1383, %v1387
      %v1389 = vlaneseq
      %v1390 = vshrl.u32 %v1389, 7
      %v1391 = vsub.s32 1, %v1390
      %v1392 = vrot.slane %v1383, %v1391
      %v1403 = vunpack.c.l.b16 %v1375
      %v1404 = vunpack.c.h.b16 %v1375
      %v1405 = vunpack.c.l.b16 %v1376
      %v1406 = vunpack.c.h.b16 %v1376
      %v1407 = vunpack.c.l.b16 %v1377
      %v1408 = vunpack.c.h.b16 %v1377
      %v1409 = vunpack.c.l.b16 %v1378
      %v1410 = vunpack.c.h.b16 %v1378
      %v1411 = vunpack.c.l.b16 %v1379
      %v1412 = vunpack.c.h.b16 %v1379
      %v1413 = vunpack.c.l.b16 %v1380
      %v1414 = vunpack.c.h.b16 %v1380
      %v1415 = vunpack.c.l.b16 %v1381
      %v1416 = vunpack.c.h.b16 %v1381
      %v1417 = vunpack.c.l.b16 %v1382
      %v1418 = vunpack.c.h.b16 %v1382
      %v1419 = vpack.c.b16 %v1405, %v1403
      %v1420 = vpack.c.b16 %v1406, %v1404
      %v1421 = vpack.c.b16 %v1409, %v1407
      %v1422 = vpack.c.b16 %v1410, %v1408
      %v1423 = vpack.c.b16 %v1413, %v1411
      %v1424 = vpack.c.b16 %v1414, %v1412
      %v1425 = vpack.c.b16 %v1417, %v1415
      %v1426 = vpack.c.b16 %v1418, %v1416
      %v1436 = vsel %vm1094, %v1367, 0
      %v1439 = vsel %vm1094, %v1368, 0
      %v1442 = vsel %vm1094, %v1369, 0
      %v1445 = vsel %vm1094, %v1370, 0
      %v1448 = vsel %vm1094, %v1371, 0
      %v1451 = vsel %vm1094, %v1372, 0
      %v1454 = vsel %vm1094, %v1373, 0
      %v1457 = vsel %vm1094, %v1374, 0
      %1459 = vmatprep.subr.bf16.mxu0 %v1420
      %1460 = vmatpush1.bf16.msra.mxu0 %v1419
      %1461 = vmatprep.subr.bf16.mxu0 %v1422
      %1462 = vmatpush1.bf16.msra.mxu0 %v1421
      %1463 = vmatprep.subr.bf16.mxu0 %v1424
      %1464 = vmatpush1.bf16.msra.mxu0 %v1423
      %1465 = vmatprep.subr.bf16.mxu0 %v1426
      %1466 = vmatpush1.bf16.msra.mxu0 %v1425
      %1467 = vmatprep.subr.bf16.mxu0 0
      %1468 = vmatpush1.bf16.msra.mxu0 0
      %1469 = vmatprep.subr.bf16.mxu0 0
      %1470 = vmatpush1.bf16.msra.mxu0 0
      %1471 = vmatprep.subr.bf16.mxu0 0
      %1472 = vmatpush1.bf16.msra.mxu0 0
      %1473 = vmatprep.subr.bf16.mxu0 0
      %1474 = vmatpush1.bf16.msra.mxu0 0
      %1475 = vmatprep.subr.bf16.mxu0 0
      %1476 = vmatpush1.bf16.msra.mxu0 0
      %1477 = vmatprep.subr.bf16.mxu0 0
      %1478 = vmatpush1.bf16.msra.mxu0 0
      %1479 = vmatprep.subr.bf16.mxu0 0
      %1480 = vmatpush1.bf16.msra.mxu0 0
      %1481 = vmatprep.subr.bf16.mxu0 0
      %1482 = vmatpush1.bf16.msra.mxu0 0
      %1483 = vmatprep.subr.bf16.mxu0 0
      %1484 = vmatpush1.bf16.msra.mxu0 0
      %1485 = vmatprep.subr.bf16.mxu0 0
      %1486 = vmatpush1.bf16.msra.mxu0 0
      %1487 = vmatprep.subr.bf16.mxu0 0
      %1488 = vmatpush1.bf16.msra.mxu0 0
      %1489 = vmatprep.subr.bf16.mxu0 0
      %1490 = vmatpush1.bf16.msra.mxu0 0
      %1491 = vmatprep.mubr.bf16.mxu0 0
      %1492 = vmatmul.mubr.bf16.gmra.mrb[0].mxu0 %v1436
      %v1493 = vpop.f32.mrb[0].mxu0
      %v1494 = vadd.f32 %v1388, %v1493
      %v1495 = vpop.f32.mrb[0].mxu0
      %v1496 = vadd.f32 %v1392, %v1495
      %v1497 = vpop.f32.mrb[0].mxu0
      %v1498 = vadd.f32 %v1388, %v1497
      %v1499 = vpop.f32.mrb[0].mxu0
      %v1500 = vadd.f32 %v1392, %v1499
      %1501 = vmatprep.mubr.bf16.mxu0 0
      %1502 = vmatmul.mubr.bf16.gmra.mrb[0].mxu0 %v1439
      %v1503 = vpop.f32.mrb[0].mxu0
      %v1504 = vadd.f32 %v1388, %v1503
      %v1505 = vpop.f32.mrb[0].mxu0
      %v1506 = vadd.f32 %v1392, %v1505
      %v1507 = vpop.f32.mrb[0].mxu0
      %v1508 = vadd.f32 %v1388, %v1507
      %v1509 = vpop.f32.mrb[0].mxu0
      %v1510 = vadd.f32 %v1392, %v1509
      %1511 = vmatprep.mubr.bf16.mxu0 0
      %1512 = vmatmul.mubr.bf16.gmra.mrb[0].mxu0 %v1442
      %v1513 = vpop.f32.mrb[0].mxu0
      %v1514 = vadd.f32 %v1388, %v1513
      %v1515 = vpop.f32.mrb[0].mxu0
      %v1516 = vadd.f32 %v1392, %v1515
      %v1517 = vpop.f32.mrb[0].mxu0
      %v1518 = vadd.f32 %v1388, %v1517
      %v1519 = vpop.f32.mrb[0].mxu0
      %v1520 = vadd.f32 %v1392, %v1519
      %1521 = vmatprep.mubr.bf16.mxu0 0
      %1522 = vmatmul.mubr.bf16.gmra.mrb[0].mxu0 %v1445
      %v1523 = vpop.f32.mrb[0].mxu0
      %v1524 = vadd.f32 %v1388, %v1523
      %v1525 = vpop.f32.mrb[0].mxu0
      %v1526 = vadd.f32 %v1392, %v1525
      %v1527 = vpop.f32.mrb[0].mxu0
      %v1528 = vadd.f32 %v1388, %v1527
      %v1529 = vpop.f32.mrb[0].mxu0
      %v1530 = vadd.f32 %v1392, %v1529
      %1531 = vmatprep.mubr.bf16.mxu0 0
      %1532 = vmatmul.mubr.bf16.gmra.mrb[0].mxu0 %v1448
      %v1533 = vpop.f32.mrb[0].mxu0
      %v1534 = vadd.f32 %v1388, %v1533
      %v1535 = vpop.f32.mrb[0].mxu0
      %v1536 = vadd.f32 %v1392, %v1535
      %v1537 = vpop.f32.mrb[0].mxu0
      %v1538 = vadd.f32 %v1388, %v1537
      %v1539 = vpop.f32.mrb[0].mxu0
      %v1540 = vadd.f32 %v1392, %v1539
      %1541 = vmatprep.mubr.bf16.mxu0 0
      %1542 = vmatmul.mubr.bf16.gmra.mrb[0].mxu0 %v1451
      %v1543 = vpop.f32.mrb[0].mxu0
      %v1544 = vadd.f32 %v1388, %v1543
      %v1545 = vpop.f32.mrb[0].mxu0
      %v1546 = vadd.f32 %v1392, %v1545
      %v1547 = vpop.f32.mrb[0].mxu0
      %v1548 = vadd.f32 %v1388, %v1547
      %v1549 = vpop.f32.mrb[0].mxu0
      %v1550 = vadd.f32 %v1392, %v1549
      %1551 = vmatprep.mubr.bf16.mxu0 0
      %1552 = vmatmul.mubr.bf16.gmra.mrb[0].mxu0 %v1454
      %v1553 = vpop.f32.mrb[0].mxu0
      %v1554 = vadd.f32 %v1388, %v1553
      %v1555 = vpop.f32.mrb[0].mxu0
      %v1556 = vadd.f32 %v1392, %v1555
      %v1557 = vpop.f32.mrb[0].mxu0
      %v1558 = vadd.f32 %v1388, %v1557
      %v1559 = vpop.f32.mrb[0].mxu0
      %v1560 = vadd.f32 %v1392, %v1559
      %1561 = vmatprep.mubr.bf16.mxu0 0
      %1562 = vmatmul.mubr.bf16.gmra.mrb[0].mxu0 %v1457
      %v1563 = vpop.f32.mrb[0].mxu0
      %v1564 = vadd.f32 %v1388, %v1563
      %v1565 = vpop.f32.mrb[0].mxu0
      %v1566 = vadd.f32 %v1392, %v1565
      %v1567 = vpop.f32.mrb[0].mxu0
      %v1568 = vadd.f32 %v1388, %v1567
      %v1569 = vpop.f32.mrb[0].mxu0
      %v1570 = vadd.f32 %v1392, %v1569
      %1571 = vdwg.mxu0
      %v1572 = vmax.f32 %v1494, 0.0
      %v1573 = vmax.f32 %v1496, 0.0
      %v1574 = vmax.f32 %v1498, 0.0
      %v1575 = vmax.f32 %v1500, 0.0
      %v1576 = vmax.f32 %v1504, 0.0
      %v1577 = vmax.f32 %v1506, 0.0
      %v1578 = vmax.f32 %v1508, 0.0
      %v1579 = vmax.f32 %v1510, 0.0
      %v1580 = vmax.f32 %v1514, 0.0
      %v1581 = vmax.f32 %v1516, 0.0
      %v1582 = vmax.f32 %v1518, 0.0
      %v1583 = vmax.f32 %v1520, 0.0
      %v1584 = vmax.f32 %v1524, 0.0
      %v1585 = vmax.f32 %v1526, 0.0
      %v1586 = vmax.f32 %v1528, 0.0
      %v1587 = vmax.f32 %v1530, 0.0
      %v1588 = vmax.f32 %v1534, 0.0
      %v1589 = vmax.f32 %v1536, 0.0
      %v1590 = vmax.f32 %v1538, 0.0
      %v1591 = vmax.f32 %v1540, 0.0
      %v1592 = vmax.f32 %v1544, 0.0
      %v1593 = vmax.f32 %v1546, 0.0
      %v1594 = vmax.f32 %v1548, 0.0
      %v1595 = vmax.f32 %v1550, 0.0
      %v1596 = vmax.f32 %v1554, 0.0
      %v1597 = vmax.f32 %v1556, 0.0
      %v1598 = vmax.f32 %v1558, 0.0
      %v1599 = vmax.f32 %v1560, 0.0
      %v1600 = vmax.f32 %v1564, 0.0
      %v1601 = vmax.f32 %v1566, 0.0
      %v1602 = vmax.f32 %v1568, 0.0
      %v1603 = vmax.f32 %v1570, 0.0
      %v1604 = vadd.f32 %v1572, %v331
      %v1605 = vadd.f32 %v1573, %v332
      %v1606 = vadd.f32 %v1574, %v333
      %v1607 = vadd.f32 %v1575, %v334
      %v1608 = vadd.f32 %v1576, %v335
      %v1609 = vadd.f32 %v1577, %v336
      %v1610 = vadd.f32 %v1578, %v337
      %v1611 = vadd.f32 %v1579, %v338
      %v1612 = vadd.f32 %v1580, %v339
      %v1613 = vadd.f32 %v1581, %v340
      %v1614 = vadd.f32 %v1582, %v341
      %v1615 = vadd.f32 %v1583, %v342
      %v1616 = vadd.f32 %v1584, %v343
      %v1617 = vadd.f32 %v1585, %v344
      %v1618 = vadd.f32 %v1586, %v345
      %v1619 = vadd.f32 %v1587, %v346
      %v1620 = vadd.f32 %v1588, %v347
      %v1621 = vadd.f32 %v1589, %v348
      %v1622 = vadd.f32 %v1590, %v349
      %v1623 = vadd.f32 %v1591, %v350
      %v1624 = vadd.f32 %v1592, %v351
      %v1625 = vadd.f32 %v1593, %v352
      %v1626 = vadd.f32 %v1594, %v353
      %v1627 = vadd.f32 %v1595, %v354
      %v1628 = vadd.f32 %v1596, %v355
      %v1629 = vadd.f32 %v1597, %v356
      %v1630 = vadd.f32 %v1598, %v357
      %v1631 = vadd.f32 %v1599, %v358
      %v1632 = vadd.f32 %v1600, %v359
      %v1633 = vadd.f32 %v1601, %v360
      %v1634 = vadd.f32 %v1602, %v361
      %v1635 = vadd.f32 %v1603, %v362
      %1636 = vst [vmem:[%s328] sm:$0xff] %v1604
      %1637 = vst [vmem:[%s328 + $0x8] sm:$0xff] %v1605
      %1638 = vst [vmem:[%s328 + $0x10] sm:$0xff] %v1606
      %1639 = vst [vmem:[%s328 + $0x18] sm:$0xff] %v1607
      %1640 = vst [vmem:[%s328 + $0x20] sm:$0xff] %v1608
      %1641 = vst [vmem:[%s328 + $0x28] sm:$0xff] %v1609
      %1642 = vst [vmem:[%s328 + $0x30] sm:$0xff] %v1610
      %1643 = vst [vmem:[%s328 + $0x38] sm:$0xff] %v1611
      %1644 = vst [vmem:[%s328 + $0x40] sm:$0xff] %v1612
      %1645 = vst [vmem:[%s328 + $0x48] sm:$0xff] %v1613
      %1646 = vst [vmem:[%s328 + $0x50] sm:$0xff] %v1614
      %1647 = vst [vmem:[%s328 + $0x58] sm:$0xff] %v1615
      %1648 = vst [vmem:[%s328 + $0x60] sm:$0xff] %v1616
      %1649 = vst [vmem:[%s328 + $0x68] sm:$0xff] %v1617
      %1650 = vst [vmem:[%s328 + $0x70] sm:$0xff] %v1618
      %1651 = vst [vmem:[%s328 + $0x78] sm:$0xff] %v1619
      %1652 = vst [vmem:[%s328 + $0x80] sm:$0xff] %v1620
      %1653 = vst [vmem:[%s328 + $0x88] sm:$0xff] %v1621
      %1654 = vst [vmem:[%s328 + $0x90] sm:$0xff] %v1622
      %1655 = vst [vmem:[%s328 + $0x98] sm:$0xff] %v1623
      %1656 = vst [vmem:[%s328 + $0xa0] sm:$0xff] %v1624
      %1657 = vst [vmem:[%s328 + $0xa8] sm:$0xff] %v1625
      %1658 = vst [vmem:[%s328 + $0xb0] sm:$0xff] %v1626
      %1659 = vst [vmem:[%s328 + $0xb8] sm:$0xff] %v1627
      %1660 = vst [vmem:[%s328 + $0xc0] sm:$0xff] %v1628
      %1661 = vst [vmem:[%s328 + $0xc8] sm:$0xff] %v1629
      %1662 = vst [vmem:[%s328 + $0xd0] sm:$0xff] %v1630
      %1663 = vst [vmem:[%s328 + $0xd8] sm:$0xff] %v1631
      %1664 = vst [vmem:[%s328 + $0xe0] sm:$0xff] %v1632
      %1665 = vst [vmem:[%s328 + $0xe8] sm:$0xff] %v1633
      %1666 = vst [vmem:[%s328 + $0xf0] sm:$0xff] %v1634
      %1667 = vst [vmem:[%s328 + $0xf8] sm:$0xff] %v1635
      %v1668 = vmax.f32 %v331, 0.0
      %v1669 = vmax.f32 %v332, 0.0
      %v1670 = vmax.f32 %v333, 0.0
      %v1671 = vmax.f32 %v334, 0.0
      %v1672 = vmax.f32 %v335, 0.0
      %v1673 = vmax.f32 %v336, 0.0
      %v1674 = vmax.f32 %v337, 0.0
      %v1675 = vmax.f32 %v338, 0.0
      %v1676 = vmax.f32 %v339, 0.0
      %v1677 = vmax.f32 %v340, 0.0
      %v1678 = vmax.f32 %v341, 0.0
      %v1679 = vmax.f32 %v342, 0.0
      %v1680 = vmax.f32 %v343, 0.0
      %v1681 = vmax.f32 %v344, 0.0
      %v1682 = vmax.f32 %v345, 0.0
      %v1683 = vmax.f32 %v346, 0.0
      %v1684 = vmax.f32 %v347, 0.0
      %v1685 = vmax.f32 %v348, 0.0
      %v1686 = vmax.f32 %v349, 0.0
      %v1687 = vmax.f32 %v350, 0.0
      %v1688 = vmax.f32 %v351, 0.0
      %v1689 = vmax.f32 %v352, 0.0
      %v1690 = vmax.f32 %v353, 0.0
      %v1691 = vmax.f32 %v354, 0.0
      %v1692 = vmax.f32 %v355, 0.0
      %v1693 = vmax.f32 %v356, 0.0
      %v1694 = vmax.f32 %v357, 0.0
      %v1695 = vmax.f32 %v358, 0.0
      %v1696 = vmax.f32 %v359, 0.0
      %v1697 = vmax.f32 %v360, 0.0
      %v1698 = vmax.f32 %v361, 0.0
      %v1699 = vmax.f32 %v362, 0.0
      %1700 = vst [vmem:[%s321] sm:$0xff] %v1668
      %1701 = vst [vmem:[%s321 + $0x8] sm:$0xff] %v1669
      %1702 = vst [vmem:[%s321 + $0x10] sm:$0xff] %v1670
      %1703 = vst [vmem:[%s321 + $0x18] sm:$0xff] %v1671
      %1704 = vst [vmem:[%s321 + $0x20] sm:$0xff] %v1672
      %1705 = vst [vmem:[%s321 + $0x28] sm:$0xff] %v1673
      %1706 = vst [vmem:[%s321 + $0x30] sm:$0xff] %v1674
      %1707 = vst [vmem:[%s321 + $0x38] sm:$0xff] %v1675
      %1708 = vst [vmem:[%s321 + $0x40] sm:$0xff] %v1676
      %1709 = vst [vmem:[%s321 + $0x48] sm:$0xff] %v1677
      %1710 = vst [vmem:[%s321 + $0x50] sm:$0xff] %v1678
      %1711 = vst [vmem:[%s321 + $0x58] sm:$0xff] %v1679
      %1712 = vst [vmem:[%s321 + $0x60] sm:$0xff] %v1680
      %1713 = vst [vmem:[%s321 + $0x68] sm:$0xff] %v1681
      %1714 = vst [vmem:[%s321 + $0x70] sm:$0xff] %v1682
      %1715 = vst [vmem:[%s321 + $0x78] sm:$0xff] %v1683
      %1716 = vst [vmem:[%s321 + $0x80] sm:$0xff] %v1684
      %1717 = vst [vmem:[%s321 + $0x88] sm:$0xff] %v1685
      %1718 = vst [vmem:[%s321 + $0x90] sm:$0xff] %v1686
      %1719 = vst [vmem:[%s321 + $0x98] sm:$0xff] %v1687
      %1720 = vst [vmem:[%s321 + $0xa0] sm:$0xff] %v1688
      %1721 = vst [vmem:[%s321 + $0xa8] sm:$0xff] %v1689
      %1722 = vst [vmem:[%s321 + $0xb0] sm:$0xff] %v1690
      %1723 = vst [vmem:[%s321 + $0xb8] sm:$0xff] %v1691
      %1724 = vst [vmem:[%s321 + $0xc0] sm:$0xff] %v1692
      %1725 = vst [vmem:[%s321 + $0xc8] sm:$0xff] %v1693
      %1726 = vst [vmem:[%s321 + $0xd0] sm:$0xff] %v1694
      %1727 = vst [vmem:[%s321 + $0xd8] sm:$0xff] %v1695
      %1728 = vst [vmem:[%s321 + $0xe0] sm:$0xff] %v1696
      %1729 = vst [vmem:[%s321 + $0xe8] sm:$0xff] %v1697
      %1730 = vst [vmem:[%s321 + $0xf0] sm:$0xff] %v1698
      %1731 = vst [vmem:[%s321 + $0xf8] sm:$0xff] %v1699
      %s1732 = smul.u32 16, %s20
      %p1733 = scmp.lt.s32.totalorder %s1732, 31
      %s1734 = scalar_select %p1733, %s1732, 31
      %s1735 = smul.addr %s1734, 2
      %s1736 = smul.addr %s1735, 8
      %s1737 = scalar_lea.vmem %s7, %s1736
      %s1738 = smul.u32 16, %s20
      %p1739 = scmp.lt.s32.totalorder %s1738, 31
      %s1740 = scalar_select %p1739, %s1738, 31
      %s1741 = smul.addr %s1740, 2
      %s1742 = smul.addr %s1741, 8
      %s1743 = scalar_lea.vmem %s8, %s1742
      // Predicated region
      $region49: #{bottleneck_forward.1} parent=47 // pred_check
        %p1744 = pneg %p190
      $region50: #{bottleneck_forward.1} parent=47 // pred_check_branch
        %1746 = sbr.rel (%p1744) target = $region52
      $region51: #{bottleneck_forward.1} parent=47 // pred_region
        %s1747 = smul.u32 16, %s20
      $region52: #{bottleneck_forward.1} parent=47 // pred_fallthru
        _
      // Predicated region
      $region53: #{bottleneck_forward.1} parent=47 // pred_check
        %p1748 = pneg %p216
      $region54: #{bottleneck_forward.1} parent=47 // pred_check_branch
        %1750 = sbr.rel (%p1748) target = $region56
      $region55: #{bottleneck_forward.1} parent=47 // pred_region
        %s1751 = smul.u32 16, %s20
      $region56: #{bottleneck_forward.1} parent=47 // pred_fallthru
        _
    $region48: #{bottleneck_forward.1} parent=5 // pred_fallthru
      _
    %p1752 = scmp.le.s32.totalorder 2, %s15
    // Predicated region
    $region57: #{bottleneck_forward.1} parent=5 // pred_check
      %p1753 = pneg %p1752
    $region58: #{bottleneck_forward.1} parent=5 // pred_check_branch
      %1755 = sbr.rel (%p1753) target = $region60
    $region59: #{bottleneck_forward.1} parent=5 // pred_region
      %s1756 = ssub.s32 %s15, 2
      // Predicated region
      $region61: #{bottleneck_forward.1} parent=59 // pred_check
        %p1757 = pneg %p196
      $region62: #{bottleneck_forward.1} parent=59 // pred_check_branch
        %1759 = sbr.rel (%p1757) target = $region64
      $region63: #{bottleneck_forward.1} parent=59 // pred_region
        %s1760 = smul.u32 16, %s21
        %p1761 = scmp.lt.s32.totalorder %s1760, 31
        %s1762 = scalar_select %p1761, %s1760, 31
        %s1763 = smul.addr %s1762, 2
        %s1764 = smul.addr %s1763, 8
        %s1765 = scalar_lea.vmem %s7, %s1764
      $region64: #{bottleneck_forward.1} parent=59 // pred_fallthru
        _
      // Predicated region
      $region65: #{bottleneck_forward.1} parent=59 // pred_check
        %p1766 = pneg %p222
      $region66: #{bottleneck_forward.1} parent=59 // pred_check_branch
        %1768 = sbr.rel (%p1766) target = $region68
      $region67: #{bottleneck_forward.1} parent=59 // pred_region
        %s1769 = smul.u32 16, %s21
        %p1770 = scmp.lt.s32.totalorder %s1769, 31
        %s1771 = scalar_select %p1770, %s1769, 31
        %s1772 = smul.addr %s1771, 2
        %s1773 = smul.addr %s1772, 8
        %s1774 = scalar_lea.vmem %s8, %s1773
      $region68: #{bottleneck_forward.1} parent=59 // pred_fallthru
        _
    $region60: #{bottleneck_forward.1} parent=5 // pred_fallthru
      _
  $region6: #{bottleneck_forward.1} parent=0 // loop_footer
    %s19 = sadd.s32 1, %s15
  $region7: #{bottleneck_forward.1} parent=0 // loop_footer_branch
    %14 = sbr.rel target = $region3
  $region8: #{bottleneck_forward.1} parent=0 // loop_exit
    _

</llo_original>
